<compile_context>
chip_gen: v5e
topology: v5e:2x2
jax: 0.10.0
libtpu: 0.0.40
codegen_flags: <defaults>
</compile_context>

<pallas_src>
import functools

import jax
import jax.numpy as jnp
import numpy as np
from jax.experimental import pallas as pl
from jax.experimental.pallas import tpu as pltpu

KERNEL_SIZE = 7
HALO = 8                     # halo rows fetched from the next L tile
_MIB = 1024 * 1024

# Static invariants the clamped-halo trick relies on (see _conv_pool_kernel).
assert HALO >= KERNEL_SIZE - 1, "halo must cover the conv receptive field"
assert HALO % 8 == 0, "halo must be sublane aligned"


def _round_up(x, m):
    return ((x + m - 1) // m) * m


# --------------------------------------------------------------------------
# Kernel body
# --------------------------------------------------------------------------
def _conv_pool_kernel(l_out, x_ref, xh_ref, inv_len_ref, wconv_ref, bconv_ref,
                      w1_ref, b1_ref, w2_ref, b2_ref, out_ref, pooled_ref):
    """One (batch-block, L-tile) grid step.

    x_ref      : [B_t, L_t, E]  bf16 channels-last sequence tile
    xh_ref     : [B_t, HALO, E] bf16 halo rows from the next L tile
    pooled_ref : [B_t, E] f32 scratch, running conv-output sum (smart pool)
    The MLP head runs only on the last L step (pl.when).
    """
    l = pl.program_id(1)
    n_l = pl.num_programs(1)
    b_t, l_t, e = x_ref.shape

    @pl.when(l == 0)
    def _():
        pooled_ref[...] = jnp.zeros_like(pooled_ref)

    # Skip L tiles whose every conv position lies in the padded tail (>= L_out).
    @pl.when(l * l_t < l_out)
    def _():
        # Window of L_t + HALO rows covering every tap of this tile's outputs.
        win = jnp.concatenate([x_ref[...], xh_ref[...]], axis=1)

        # Conv1d (valid padding) as K shifted MXU matmuls, bf16 in / f32 acc.
        acc = jnp.zeros((b_t, l_t, e), jnp.float32)
        for k in range(KERNEL_SIZE):                  # static, fully unrolled
            acc += jax.lax.dot_general(
                win[:, k:k + l_t, :], wconv_ref[k],   # [B_t,L_t,E] x [E,E]
                dimension_numbers=(((2,), (0,)), ((), ())),
                preferred_element_type=jnp.float32)
        acc = jnp.maximum(acc + bconv_ref[...][None], 0.0)   # bias + ReLU
        # conv_dropout / dropout are identity at inference time.

        straddles_tail = (l + 1) * l_t > l_out

        @pl.when(jnp.logical_not(straddles_tail))
        def _():
            # Interior tile: every position is a real conv output.
            pooled_ref[...] += jnp.sum(acc, axis=1)

        @pl.when(straddles_tail)
        def _():
            # Boundary tile: zero positions past L_out before reducing (keeps
            # the reference sum over exactly L_out positions and hides the
            # garbage computed from the clamped halo rows of the last tile).
            pos = l * l_t + jax.lax.broadcasted_iota(jnp.int32, (1, l_t, 1), 1)
            pooled_ref[...] += jnp.sum(jnp.where(pos < l_out, acc, 0.0), axis=1)

    @pl.when(l == n_l - 1)
    def _():
        # "smart" average pool: sum / sequence_lengths (reciprocal precomputed).
        pooled = pooled_ref[...] * inv_len_ref[...]            # [B_t,E]*[B_t,1]
        # Linear(E,32) -> Dropout(id) -> ReLU   (hidden padded to 128 lanes).
        # Kept fused (runs once per batch block) to avoid an extra HBM
        # round-trip of the pooled activations.
        h = jnp.dot(pooled, w1_ref[...],
                    preferred_element_type=jnp.float32) + b1_ref[...]
        h = jnp.maximum(h, 0.0)
        # Eval-mode BatchNorm1d is folded into w2/b2 in the wrapper.
        out = jnp.dot(h, w2_ref[...],
                      preferred_element_type=jnp.float32) + b2_ref[...]
        out_ref[...] = out.astype(out_ref.dtype)


# --------------------------------------------------------------------------
# Generation-aware tiling helpers
# --------------------------------------------------------------------------
def _vmem_budget_bytes():
    """Scoped-VMEM budget from the running chip (v5e/v6e 128 MiB, v7x 64 MiB)."""
    try:
        cap = int(pltpu.get_tpu_info().vmem_capacity_bytes)
    except Exception:                 # non-TPU tracing / older API: conservative
        cap = 64 * _MIB
    return int(max(32 * _MIB, min(112 * _MIB, cap - 12 * _MIB)))


def _choose_l_tile(b_t, e, h_pad, out_pad, l_len, vmem_budget):
    """Largest L tile whose per-step working set fits the VMEM budget."""
    k = KERNEL_SIZE
    fixed = (k * e * e * 2                       # conv weight, bf16, 1-buffered
             + e * 4                             # conv bias
             + e * h_pad * 4 + h_pad * 4         # head linear 1 (1-buffered)
             + h_pad * out_pad * 4 + out_pad * 4  # head linear 2 (1-buffered)
             + b_t * e * 4                       # pooled accumulator scratch
             + 2 * b_t * out_pad * 4             # output block (dbl-buffered)
             + 2 * b_t * 4)                      # 1/seq_len block
    l_t_cap = min(512, _round_up(max(l_len, 8), 8))
    best = 8
    for cand in (8, 16, 32, 64, 128, 192, 256, 384, 512):
        if cand > l_t_cap:
            break
        per_step = (2 * b_t * cand * e * 2       # x tile, bf16, dbl-buffered
                    + 2 * b_t * HALO * e * 2     # halo tile, dbl-buffered
                    + b_t * (cand + HALO) * e * 2  # concatenated window (bf16)
                    + 2 * b_t * cand * e * 4)    # f32 acc + shifted-slice temp
        if fixed + per_step <= vmem_budget:
            best = cand
    return best


# --------------------------------------------------------------------------
# Host wrappers
# --------------------------------------------------------------------------
def conv_avg_smart_pool_nle(x_nle, sequence_lengths, params):
    """Channels-last entry point.  x_nle: [B, L, E] float.  Returns [B, OUT]."""
    K = KERNEL_SIZE
    B, L, E = x_nle.shape
    assert L >= K, "sequence must be at least kernel_size long"
    L_out = L - K + 1
    H = params["w1"].shape[1]
    OUT = params["w2"].shape[1]

    # ---- batch tiling: >=2 batch blocks whenever B >= 2 so the "parallel"
    # grid axis shards across v7x's two TensorCores (no-op on v5e/v6e). ------
    B_t = max(1, min(8, -(-B // 2)))
    n_b = -(-B // B_t)
    B_pad = n_b * B_t

    H_pad = _round_up(H, 128)
    OUT_pad = _round_up(OUT, 128)

    vmem_budget = _vmem_budget_bytes()
    L_t = _choose_l_tile(B_t, E, H_pad, OUT_pad, L, vmem_budget)
    L_pad = _round_up(max(L, L_t), L_t)
    n_l = L_pad // L_t

    # Clamped-halo invariants: the final tile's halo block is clamped to the
    # last HALO rows of x; every conv position reading it is >= L_pad-(K-1)
    # >= L_out and therefore masked before accumulation.
    assert L_t % HALO == 0 and L_pad % HALO == 0
    assert L_pad >= L and L_pad - (K - 1) >= L_out

    # Single fused XLA pass: bf16 cast + batch/L zero-pad (+ the shim's
    # transpose when called via the NCL entry point below).
    x = x_nle.astype(jnp.bfloat16)
    x = jnp.pad(x, ((0, B_pad - B), (0, L_pad - L), (0, 0)))
    x = x.reshape(n_b, B_t, L_pad, E)               # free leading-dim reshape

    inv_len = (1.0 / sequence_lengths.astype(jnp.float32)).reshape(B, 1)
    inv_len = jnp.pad(inv_len, ((0, B_pad - B), (0, 0)), constant_values=1.0)
    inv_len = inv_len.reshape(n_b, B_t, 1)

    # ---- head params: fold eval-mode BN into the output linear, pad widths --
    w1 = jnp.pad(params["w1"], ((0, 0), (0, H_pad - H)))
    b1 = jnp.pad(params["b1"], ((0, 0), (0, H_pad - H)))
    w2f = params["bn_scale"].reshape(H, 1) * params["w2"]            # [H, OUT]
    b2f = params["bn_shift"] @ params["w2"] + params["b2"]           # [1, OUT]
    w2f = jnp.pad(w2f, ((0, H_pad - H), (0, OUT_pad - OUT)))
    b2f = jnp.pad(b2f, ((0, 0), (0, OUT_pad - OUT)))

    wconv = params["wconv"].astype(jnp.bfloat16)                     # [K, E, E]
    bconv = params["bconv"]                                          # [1, E]

    lt_blocks = L_t // HALO
    halo_last = L_pad // HALO - 1

    def call(param_pipeline_mode):
        # Grid-invariant parameters are single-buffered: their index_maps are
        # constant, so a second buffer only doubles VMEM without hiding DMA.
        pk = ({} if param_pipeline_mode is None
              else dict(pipeline_mode=param_pipeline_mode))
        in_specs = [
            # main x tile (channels-last)
            pl.BlockSpec((None, B_t, L_t, E), lambda b, l: (b, 0, l, 0)),
            # 8-row halo from the next L tile (clamped on the last tile; only
            # masked positions ever consume the clamped rows)
            pl.BlockSpec((None, B_t, HALO, E),
                         lambda b, l: (b, 0, jnp.minimum((l + 1) * lt_blocks,
                                                         halo_last), 0)),
            pl.BlockSpec((None, B_t, 1), lambda b, l: (b, 0, 0)),     # 1/len
            pl.BlockSpec((K, E, E), lambda b, l: (0, 0, 0), **pk),    # conv w
            pl.BlockSpec((1, E), lambda b, l: (0, 0), **pk),          # conv b
            pl.BlockSpec((E, H_pad), lambda b, l: (0, 0), **pk),      # w1
            pl.BlockSpec((1, H_pad), lambda b, l: (0, 0), **pk),      # b1
            pl.BlockSpec((H_pad, OUT_pad), lambda b, l: (0, 0), **pk),  # w2(BN)
            pl.BlockSpec((1, OUT_pad), lambda b, l: (0, 0), **pk),      # b2(BN)
        ]
        out_spec = pl.BlockSpec((None, B_t, OUT_pad), lambda b, l: (b, 0, 0))
        return pl.pallas_call(
            functools.partial(_conv_pool_kernel, L_out),
            out_shape=jax.ShapeDtypeStruct((n_b, B_t, OUT_pad), jnp.float32),
            grid=(n_b, n_l),
            in_specs=in_specs,
            out_specs=out_spec,
            scratch_shapes=[pltpu.VMEM((B_t, E), jnp.float32)],       # pooled
            compiler_params=pltpu.CompilerParams(
                dimension_semantics=("parallel", "arbitrary"),
                vmem_limit_bytes=vmem_budget),
        )(x, x, inv_len, wconv, bconv, w1, b1, w2f, b2f)

    # Prefer single-buffered invariant params; fall back to default
    # double-buffering if this Pallas build rejects pipeline_mode/Buffered(1).
    modes = ([pl.Buffered(1)] if hasattr(pl, "Buffered") else []) + [None]
    out, err = None, None
    for mode in modes:
        try:
            out = jax.block_until_ready(call(mode))
            break
        except Exception as e:
            err = e
    if out is None:
        raise err

    return out.reshape(B_pad, OUT_pad)[:B, :OUT]


def conv_avg_smart_pool(x_ncl, sequence_lengths, params):
    """PyTorch-layout entry.  x_ncl: [B, E, L] (NCL).  Returns [B, output_dim].

    TODO(synk): have the upstream producer emit channels-last [B, L, E]
    directly (or fuse this transpose into it); the transpose below adds one
    extra HBM pass over x that conv_avg_smart_pool_nle does not need.
    """
    return conv_avg_smart_pool_nle(jnp.transpose(x_ncl, (0, 2, 1)),
                                   sequence_lengths, params)


# --------------------------------------------------------------------------
# Parameters + pure-JAX reference
# --------------------------------------------------------------------------
def init_params(key, embeddings_dim, output_dim, hidden=32, eps=1e-5):
    """Deterministic synthetic parameters matching the PyTorch module shapes."""
    k0, k1, k2, k3, k4, k5 = jax.random.split(key, 6)
    E, H, K = embeddings_dim, hidden, KERNEL_SIZE
    # PyTorch Conv1d weight is [E_out, E_in, K]; store as [K, E_in, E_out].
    wconv_pt = jax.random.normal(k0, (E, E, K), jnp.float32) * 0.05
    wconv = jnp.transpose(wconv_pt, (2, 1, 0))
    bconv = jax.random.normal(k1, (1, E), jnp.float32) * 0.05
    w1 = jax.random.normal(k2, (E, H), jnp.float32) * 0.05
    b1 = jax.random.normal(k3, (1, H), jnp.float32) * 0.05
    # BatchNorm1d(32) eval mode, default init: gamma=1, beta=0, mean=0, var=1.
    gamma = jnp.ones((1, H), jnp.float32)
    beta = jnp.zeros((1, H), jnp.float32)
    running_mean = jnp.zeros((1, H), jnp.float32)
    running_var = jnp.ones((1, H), jnp.float32)
    bn_scale = gamma / jnp.sqrt(running_var + eps)
    bn_shift = beta - running_mean * bn_scale
    w2 = jax.random.normal(k4, (H, output_dim), jnp.float32) * 0.05
    b2 = jax.random.normal(k5, (1, output_dim), jnp.float32) * 0.05
    return dict(wconv=wconv, bconv=bconv, w1=w1, b1=b1,
                bn_scale=bn_scale, bn_shift=bn_shift, w2=w2, b2=b2)


def reference_forward(x_ncl, sequence_lengths, params):
    """Pure-JAX reference (same math; x/wconv rounded to bf16 like the kernel)."""
    x = jnp.transpose(x_ncl, (0, 2, 1)).astype(jnp.bfloat16).astype(jnp.float32)
    wc = params["wconv"].astype(jnp.bfloat16).astype(jnp.float32)
    B, L, E = x.shape
    L_out = L - KERNEL_SIZE + 1
    acc = jnp.zeros((B, L_out, E), jnp.float32)
    for k in range(KERNEL_SIZE):
        acc = acc + jnp.einsum("ble,ef->blf", x[:, k:k + L_out, :], wc[k],
                               preferred_element_type=jnp.float32)
    acc = jnp.maximum(acc + params["bconv"][None], 0.0)
    pooled = acc.sum(axis=1) / sequence_lengths.astype(jnp.float32)[:, None]
    h = jnp.maximum(pooled @ params["w1"] + params["b1"], 0.0)
    h = h * params["bn_scale"] + params["bn_shift"]
    return h @ params["w2"] + params["b2"]


if __name__ == "__main__":
    # Small shapes consistent with the module (scaled down from E=1024).
    B, E, L, OUT = 4, 32, 16, 10

    key = jax.random.PRNGKey(0)
    kx, kp = jax.random.split(key, 2)
    x = jax.random.normal(kx, (B, E, L), jnp.float32)             # PyTorch NCL
    sequence_lengths = jnp.array([16, 14, 12, 10], jnp.int32)
    params = init_params(kp, embeddings_dim=E, output_dim=OUT)
    # mask / frequencies are unused by the reference forward -> not passed.

    out = jax.block_until_ready(conv_avg_smart_pool(x, sequence_lengths, params))
    ref = reference_forward(x, sequence_lengths, params)

    np.testing.assert_allclose(np.asarray(out), np.asarray(ref),
                               rtol=1e-3, atol=1e-3)
    assert out.shape == (B, OUT)
    print("KERNEL_OK")
</pallas_src>

<mosaic_0001>
module attributes {stable_mosaic.version = 11 : i64} {
  func.func @_conv_pool_kernel(%arg0: i32, %arg1: i32, %arg2: memref<1x2x16x32xbf16, #tpu.memory_space<vmem>>, %arg3: memref<1x2x8x32xbf16, #tpu.memory_space<vmem>>, %arg4: memref<1x2x1xf32, #tpu.memory_space<vmem>>, %arg5: memref<7x32x32xbf16, #tpu.memory_space<vmem>>, %arg6: memref<1x32xf32, #tpu.memory_space<vmem>>, %arg7: memref<32x128xf32, #tpu.memory_space<vmem>>, %arg8: memref<1x128xf32, #tpu.memory_space<vmem>>, %arg9: memref<128x128xf32, #tpu.memory_space<vmem>>, %arg10: memref<1x128xf32, #tpu.memory_space<vmem>>, %arg11: memref<1x2x128xf32, #tpu.memory_space<vmem>>, %arg12: memref<2x32xf32, #tpu.memory_space<vmem>>) attributes {dimension_semantics = [#tpu.dimension_semantics<parallel>, #tpu.dimension_semantics<arbitrary>], iteration_bounds = array<i64: 2, 1>, scalar_prefetch = 0 : i64, scratch_operands = 1 : i64, tpu.core_type = #tpu.core_type<tc>, window_params = [{transform_indices = @transform_0, window_bounds = array<i64: 1, 2, 16, 32>}, {transform_indices = @transform_1, window_bounds = array<i64: 1, 2, 8, 32>}, {transform_indices = @transform_2, window_bounds = array<i64: 1, 2, 1>}, {pipeline_mode = #tpu.pipeline_mode<synchronous>, transform_indices = @transform_3, window_bounds = array<i64: 7, 32, 32>}, {pipeline_mode = #tpu.pipeline_mode<synchronous>, transform_indices = @transform_4, window_bounds = array<i64: 1, 32>}, {pipeline_mode = #tpu.pipeline_mode<synchronous>, transform_indices = @transform_5, window_bounds = array<i64: 32, 128>}, {pipeline_mode = #tpu.pipeline_mode<synchronous>, transform_indices = @transform_6, window_bounds = array<i64: 1, 128>}, {pipeline_mode = #tpu.pipeline_mode<synchronous>, transform_indices = @transform_7, window_bounds = array<i64: 128, 128>}, {pipeline_mode = #tpu.pipeline_mode<synchronous>, transform_indices = @transform_8, window_bounds = array<i64: 1, 128>}, {transform_indices = @transform_9, window_bounds = array<i64: 1, 2, 128>}]} {
    %c0_i32 = arith.constant 0 : i32
    %0 = arith.cmpi eq, %arg1, %c0_i32 : i32
    %1 = arith.extui %0 : i1 to i32
    %c0_i32_0 = arith.constant 0 : i32
    %2 = arith.cmpi ne, %1, %c0_i32_0 : i32
    scf.if %2 {
      %cst = arith.constant 0.000000e+00 : f32
      %10 = vector.broadcast %cst : f32 to vector<2x32xf32>
      %c0 = arith.constant 0 : index
      %c0_4 = arith.constant 0 : index
      %11 = vector.load %arg12[%c0, %c0_4] : memref<2x32xf32, #tpu.memory_space<vmem>>, vector<2x32xf32>
      tpu.vector_store %arg12[%c0, %c0_4], %10 {strides = array<i32>} : memref<2x32xf32, #tpu.memory_space<vmem>>, vector<2x32xf32>,
    } else {
    }
    %c16_i32 = arith.constant 16 : i32
    %3 = arith.muli %arg1, %c16_i32 : i32
    %c10_i32 = arith.constant 10 : i32
    %4 = arith.cmpi slt, %3, %c10_i32 : i32
    %5 = arith.extui %4 : i1 to i32
    %c0_i32_1 = arith.constant 0 : i32
    %6 = arith.cmpi ne, %5, %c0_i32_1 : i32
    scf.if %6 {
      %c0 = arith.constant 0 : index
      %c0_4 = arith.constant 0 : index
      %c0_5 = arith.constant 0 : index
      %c0_6 = arith.constant 0 : index
      %10 = vector.load %arg2[%c0, %c0_4, %c0_5, %c0_6] : memref<1x2x16x32xbf16, #tpu.memory_space<vmem>>, vector<1x2x16x32xbf16>
      %11 = vector.shape_cast %10 : vector<1x2x16x32xbf16> to vector<2x16x32xbf16>
      %c0_7 = arith.constant 0 : index
      %c0_8 = arith.constant 0 : index
      %c0_9 = arith.constant 0 : index
      %c0_10 = arith.constant 0 : index
      %12 = vector.load %arg3[%c0_7, %c0_8, %c0_9, %c0_10] : memref<1x2x8x32xbf16, #tpu.memory_space<vmem>>, vector<1x2x8x32xbf16>
      %13 = vector.shape_cast %12 : vector<1x2x8x32xbf16> to vector<2x8x32xbf16>
      %14 = tpu.concatenate %11, %13 in 1 : vector<2x16x32xbf16>, vector<2x8x32xbf16> -> vector<2x24x32xbf16>
      %cst = arith.constant 0.000000e+00 : f32
      %15 = vector.broadcast %cst : f32 to vector<2x16x32xf32>
      %16 = vector.extract_strided_slice %14 {offsets = [0, 0, 0], sizes = [2, 16, 32], strides = [1, 1, 1]} : vector<2x24x32xbf16> to vector<2x16x32xbf16>
      %c0_11 = arith.constant 0 : index
      %c0_12 = arith.constant 0 : index
      %c0_13 = arith.constant 0 : index
      %17 = vector.load %arg5[%c0_11, %c0_12, %c0_13] : memref<7x32x32xbf16, #tpu.memory_space<vmem>>, vector<1x32x32xbf16>
      %18 = vector.shape_cast %17 : vector<1x32x32xbf16> to vector<32x32xbf16>
      %cst_14 = arith.constant dense<0.000000e+00> : vector<2x16x32xf32>
      %19 = tpu.matmul %16, %18, %cst_14 {dimension_numbers = #tpu.dot_dimension_numbers<[2], [0], [0, 1], [1], [0, 0, 0, 1, 1, 1], [], []>} : vector<2x16x32xbf16>, vector<32x32xbf16>, vector<2x16x32xf32> -> vector<2x16x32xf32>
      %20 = arith.addf %15, %19 : vector<2x16x32xf32>
      %21 = vector.extract_strided_slice %14 {offsets = [0, 1, 0], sizes = [2, 16, 32], strides = [1, 1, 1]} : vector<2x24x32xbf16> to vector<2x16x32xbf16>
      %c1 = arith.constant 1 : index
      %c0_15 = arith.constant 0 : index
      %c0_16 = arith.constant 0 : index
      %22 = vector.load %arg5[%c1, %c0_15, %c0_16] : memref<7x32x32xbf16, #tpu.memory_space<vmem>>, vector<1x32x32xbf16>
      %23 = vector.shape_cast %22 : vector<1x32x32xbf16> to vector<32x32xbf16>
      %cst_17 = arith.constant dense<0.000000e+00> : vector<2x16x32xf32>
      %24 = tpu.matmul %21, %23, %cst_17 {dimension_numbers = #tpu.dot_dimension_numbers<[2], [0], [0, 1], [1], [0, 0, 0, 1, 1, 1], [], []>} : vector<2x16x32xbf16>, vector<32x32xbf16>, vector<2x16x32xf32> -> vector<2x16x32xf32>
      %25 = arith.addf %20, %24 : vector<2x16x32xf32>
      %26 = vector.extract_strided_slice %14 {offsets = [0, 2, 0], sizes = [2, 16, 32], strides = [1, 1, 1]} : vector<2x24x32xbf16> to vector<2x16x32xbf16>
      %c2 = arith.constant 2 : index
      %c0_18 = arith.constant 0 : index
      %c0_19 = arith.constant 0 : index
      %27 = vector.load %arg5[%c2, %c0_18, %c0_19] : memref<7x32x32xbf16, #tpu.memory_space<vmem>>, vector<1x32x32xbf16>
      %28 = vector.shape_cast %27 : vector<1x32x32xbf16> to vector<32x32xbf16>
      %cst_20 = arith.constant dense<0.000000e+00> : vector<2x16x32xf32>
      %29 = tpu.matmul %26, %28, %cst_20 {dimension_numbers = #tpu.dot_dimension_numbers<[2], [0], [0, 1], [1], [0, 0, 0, 1, 1, 1], [], []>} : vector<2x16x32xbf16>, vector<32x32xbf16>, vector<2x16x32xf32> -> vector<2x16x32xf32>
      %30 = arith.addf %25, %29 : vector<2x16x32xf32>
      %31 = vector.extract_strided_slice %14 {offsets = [0, 3, 0], sizes = [2, 16, 32], strides = [1, 1, 1]} : vector<2x24x32xbf16> to vector<2x16x32xbf16>
      %c3 = arith.constant 3 : index
      %c0_21 = arith.constant 0 : index
      %c0_22 = arith.constant 0 : index
      %32 = vector.load %arg5[%c3, %c0_21, %c0_22] : memref<7x32x32xbf16, #tpu.memory_space<vmem>>, vector<1x32x32xbf16>
      %33 = vector.shape_cast %32 : vector<1x32x32xbf16> to vector<32x32xbf16>
      %cst_23 = arith.constant dense<0.000000e+00> : vector<2x16x32xf32>
      %34 = tpu.matmul %31, %33, %cst_23 {dimension_numbers = #tpu.dot_dimension_numbers<[2], [0], [0, 1], [1], [0, 0, 0, 1, 1, 1], [], []>} : vector<2x16x32xbf16>, vector<32x32xbf16>, vector<2x16x32xf32> -> vector<2x16x32xf32>
      %35 = arith.addf %30, %34 : vector<2x16x32xf32>
      %36 = vector.extract_strided_slice %14 {offsets = [0, 4, 0], sizes = [2, 16, 32], strides = [1, 1, 1]} : vector<2x24x32xbf16> to vector<2x16x32xbf16>
      %c4 = arith.constant 4 : index
      %c0_24 = arith.constant 0 : index
      %c0_25 = arith.constant 0 : index
      %37 = vector.load %arg5[%c4, %c0_24, %c0_25] : memref<7x32x32xbf16, #tpu.memory_space<vmem>>, vector<1x32x32xbf16>
      %38 = vector.shape_cast %37 : vector<1x32x32xbf16> to vector<32x32xbf16>
      %cst_26 = arith.constant dense<0.000000e+00> : vector<2x16x32xf32>
      %39 = tpu.matmul %36, %38, %cst_26 {dimension_numbers = #tpu.dot_dimension_numbers<[2], [0], [0, 1], [1], [0, 0, 0, 1, 1, 1], [], []>} : vector<2x16x32xbf16>, vector<32x32xbf16>, vector<2x16x32xf32> -> vector<2x16x32xf32>
      %40 = arith.addf %35, %39 : vector<2x16x32xf32>
      %41 = vector.extract_strided_slice %14 {offsets = [0, 5, 0], sizes = [2, 16, 32], strides = [1, 1, 1]} : vector<2x24x32xbf16> to vector<2x16x32xbf16>
      %c5 = arith.constant 5 : index
      %c0_27 = arith.constant 0 : index
      %c0_28 = arith.constant 0 : index
      %42 = vector.load %arg5[%c5, %c0_27, %c0_28] : memref<7x32x32xbf16, #tpu.memory_space<vmem>>, vector<1x32x32xbf16>
      %43 = vector.shape_cast %42 : vector<1x32x32xbf16> to vector<32x32xbf16>
      %cst_29 = arith.constant dense<0.000000e+00> : vector<2x16x32xf32>
      %44 = tpu.matmul %41, %43, %cst_29 {dimension_numbers = #tpu.dot_dimension_numbers<[2], [0], [0, 1], [1], [0, 0, 0, 1, 1, 1], [], []>} : vector<2x16x32xbf16>, vector<32x32xbf16>, vector<2x16x32xf32> -> vector<2x16x32xf32>
      %45 = arith.addf %40, %44 : vector<2x16x32xf32>
      %46 = vector.extract_strided_slice %14 {offsets = [0, 6, 0], sizes = [2, 16, 32], strides = [1, 1, 1]} : vector<2x24x32xbf16> to vector<2x16x32xbf16>
      %c6 = arith.constant 6 : index
      %c0_30 = arith.constant 0 : index
      %c0_31 = arith.constant 0 : index
      %47 = vector.load %arg5[%c6, %c0_30, %c0_31] : memref<7x32x32xbf16, #tpu.memory_space<vmem>>, vector<1x32x32xbf16>
      %48 = vector.shape_cast %47 : vector<1x32x32xbf16> to vector<32x32xbf16>
      %cst_32 = arith.constant dense<0.000000e+00> : vector<2x16x32xf32>
      %49 = tpu.matmul %46, %48, %cst_32 {dimension_numbers = #tpu.dot_dimension_numbers<[2], [0], [0, 1], [1], [0, 0, 0, 1, 1, 1], [], []>} : vector<2x16x32xbf16>, vector<32x32xbf16>, vector<2x16x32xf32> -> vector<2x16x32xf32>
      %50 = arith.addf %45, %49 : vector<2x16x32xf32>
      %c0_33 = arith.constant 0 : index
      %c0_34 = arith.constant 0 : index
      %51 = vector.load %arg6[%c0_33, %c0_34] : memref<1x32xf32, #tpu.memory_space<vmem>>, vector<1x32xf32>
      %52 = vector.shape_cast %51 : vector<1x32xf32> to vector<1x1x32xf32>
      %53 = vector.broadcast %52 : vector<1x1x32xf32> to vector<2x16x32xf32>
      %54 = arith.addf %50, %53 : vector<2x16x32xf32>
      %cst_35 = arith.constant 0.000000e+00 : f32
      %55 = vector.broadcast %cst_35 : f32 to vector<2x16x32xf32>
      %56 = arith.maximumf %54, %55 : vector<2x16x32xf32>
      %c1_i32 = arith.constant 1 : i32
      %57 = arith.addi %arg1, %c1_i32 : i32
      %c16_i32_36 = arith.constant 16 : i32
      %58 = arith.muli %57, %c16_i32_36 : i32
      %c10_i32_37 = arith.constant 10 : i32
      %59 = arith.cmpi sgt, %58, %c10_i32_37 : i32
      %true = arith.constant true
      %60 = arith.xori %59, %true : i1
      %61 = arith.extui %60 : i1 to i32
      %c0_i32_38 = arith.constant 0 : i32
      %62 = arith.cmpi ne, %61, %c0_i32_38 : i32
      scf.if %62 {
        %c0_40 = arith.constant 0 : index
        %c0_41 = arith.constant 0 : index
        %65 = vector.load %arg12[%c0_40, %c0_41] : memref<2x32xf32, #tpu.memory_space<vmem>>, vector<2x32xf32>
        %cst_42 = arith.constant dense<0.000000e+00> : vector<2x32xf32>
        %66 = vector.multi_reduction <add>, %56, %cst_42 [1] : vector<2x16x32xf32> to vector<2x32xf32>
        %67 = arith.addf %65, %66 : vector<2x32xf32>
        %c0_43 = arith.constant 0 : index
        %c0_44 = arith.constant 0 : index
        %68 = vector.load %arg12[%c0_43, %c0_44] : memref<2x32xf32, #tpu.memory_space<vmem>>, vector<2x32xf32>
        tpu.vector_store %arg12[%c0_43, %c0_44], %67 {strides = array<i32>} : memref<2x32xf32, #tpu.memory_space<vmem>>, vector<2x32xf32>,
      } else {
      }
      %63 = arith.extui %59 : i1 to i32
      %c0_i32_39 = arith.constant 0 : i32
      %64 = arith.cmpi ne, %63, %c0_i32_39 : i32
      scf.if %64 {
        %c16_i32_40 = arith.constant 16 : i32
        %65 = arith.muli %arg1, %c16_i32_40 : i32
        %66 = tpu.iota {dimensions = array<i32: 1>} : vector<1x16x1xi32>
        %67 = vector.broadcast %65 : i32 to vector<1x16x1xi32>
        %68 = arith.addi %67, %66 : vector<1x16x1xi32>
        %c0_41 = arith.constant 0 : index
        %c0_42 = arith.constant 0 : index
        %69 = vector.load %arg12[%c0_41, %c0_42] : memref<2x32xf32, #tpu.memory_space<vmem>>, vector<2x32xf32>
        %c10_i32_43 = arith.constant 10 : i32
        %70 = vector.broadcast %c10_i32_43 : i32 to vector<1x16x1xi32>
        %71 = arith.cmpi slt, %68, %70 : vector<1x16x1xi32>
        %cst_44 = arith.constant 0.000000e+00 : f32
        %72 = vector.shape_cast %71 : vector<1x16x1xi1> to vector<1x16x1xi1>
        %73 = vector.broadcast %72 : vector<1x16x1xi1> to vector<2x16x32xi1>
        %74 = vector.broadcast %cst_44 : f32 to vector<2x16x32xf32>
        %75 = arith.select %73, %56, %74 : vector<2x16x32xi1>, vector<2x16x32xf32>
        %cst_45 = arith.constant dense<0.000000e+00> : vector<2x32xf32>
        %76 = vector.multi_reduction <add>, %75, %cst_45 [1] : vector<2x16x32xf32> to vector<2x32xf32>
        %77 = arith.addf %69, %76 : vector<2x32xf32>
        %c0_46 = arith.constant 0 : index
        %c0_47 = arith.constant 0 : index
        %78 = vector.load %arg12[%c0_46, %c0_47] : memref<2x32xf32, #tpu.memory_space<vmem>>, vector<2x32xf32>
        tpu.vector_store %arg12[%c0_46, %c0_47], %77 {strides = array<i32>} : memref<2x32xf32, #tpu.memory_space<vmem>>, vector<2x32xf32>,
      } else {
      }
    } else {
    }
    %c0_i32_2 = arith.constant 0 : i32
    %7 = arith.cmpi eq, %arg1, %c0_i32_2 : i32
    %8 = arith.extui %7 : i1 to i32
    %c0_i32_3 = arith.constant 0 : i32
    %9 = arith.cmpi ne, %8, %c0_i32_3 : i32
    scf.if %9 {
      %c0 = arith.constant 0 : index
      %c0_4 = arith.constant 0 : index
      %10 = vector.load %arg12[%c0, %c0_4] : memref<2x32xf32, #tpu.memory_space<vmem>>, vector<2x32xf32>
      %c0_5 = arith.constant 0 : index
      %c0_6 = arith.constant 0 : index
      %c0_7 = arith.constant 0 : index
      %11 = vector.load %arg4[%c0_5, %c0_6, %c0_7] : memref<1x2x1xf32, #tpu.memory_space<vmem>>, vector<1x2x1xf32>
      %12 = vector.shape_cast %11 : vector<1x2x1xf32> to vector<2x1xf32>
      %13 = vector.broadcast %12 : vector<2x1xf32> to vector<2x32xf32>
      %14 = arith.mulf %10, %13 : vector<2x32xf32>
      %c0_8 = arith.constant 0 : index
      %c0_9 = arith.constant 0 : index
      %15 = vector.load %arg7[%c0_8, %c0_9] : memref<32x128xf32, #tpu.memory_space<vmem>>, vector<32x128xf32>
      %cst = arith.constant dense<0.000000e+00> : vector<2x128xf32>
      %16 = tpu.matmul %14, %15, %cst {dimension_numbers = #tpu.dot_dimension_numbers<[1], [0], [0], [1], [0, 0, 1, 1], [], []>} : vector<2x32xf32>, vector<32x128xf32>, vector<2x128xf32> -> vector<2x128xf32>
      %c0_10 = arith.constant 0 : index
      %c0_11 = arith.constant 0 : index
      %17 = vector.load %arg8[%c0_10, %c0_11] : memref<1x128xf32, #tpu.memory_space<vmem>>, vector<1x128xf32>
      %18 = vector.broadcast %17 : vector<1x128xf32> to vector<2x128xf32>
      %19 = arith.addf %16, %18 : vector<2x128xf32>
      %cst_12 = arith.constant 0.000000e+00 : f32
      %20 = vector.broadcast %cst_12 : f32 to vector<2x128xf32>
      %21 = arith.maximumf %19, %20 : vector<2x128xf32>
      %c0_13 = arith.constant 0 : index
      %c0_14 = arith.constant 0 : index
      %22 = vector.load %arg9[%c0_13, %c0_14] : memref<128x128xf32, #tpu.memory_space<vmem>>, vector<128x128xf32>
      %cst_15 = arith.constant dense<0.000000e+00> : vector<2x128xf32>
      %23 = tpu.matmul %21, %22, %cst_15 {dimension_numbers = #tpu.dot_dimension_numbers<[1], [0], [0], [1], [0, 0, 1, 1], [], []>} : vector<2x128xf32>, vector<128x128xf32>, vector<2x128xf32> -> vector<2x128xf32>
      %c0_16 = arith.constant 0 : index
      %c0_17 = arith.constant 0 : index
      %24 = vector.load %arg10[%c0_16, %c0_17] : memref<1x128xf32, #tpu.memory_space<vmem>>, vector<1x128xf32>
      %25 = vector.broadcast %24 : vector<1x128xf32> to vector<2x128xf32>
      %26 = arith.addf %23, %25 : vector<2x128xf32>
      %c0_18 = arith.constant 0 : index
      %c0_19 = arith.constant 0 : index
      %c0_20 = arith.constant 0 : index
      %27 = vector.load %arg11[%c0_18, %c0_19, %c0_20] : memref<1x2x128xf32, #tpu.memory_space<vmem>>, vector<1x2x128xf32>
      %28 = vector.shape_cast %27 : vector<1x2x128xf32> to vector<2x128xf32>
      %29 = vector.shape_cast %26 : vector<2x128xf32> to vector<1x2x128xf32>
      tpu.vector_store %arg11[%c0_18, %c0_19, %c0_20], %29 {strides = array<i32>} : memref<1x2x128xf32, #tpu.memory_space<vmem>>, vector<1x2x128xf32>,
    } else {
    }
    return
  }
  func.func @transform_0(%arg0: i32, %arg1: i32) -> (i32, i32, i32, i32) {
    %c0_i32 = arith.constant 0 : i32
    %c0_i32_0 = arith.constant 0 : i32
    %c0_i32_1 = arith.constant 0 : i32
    return %arg0, %c0_i32, %arg1, %c0_i32_0 : i32, i32, i32, i32
  }
  func.func @transform_1(%arg0: i32, %arg1: i32) -> (i32, i32, i32, i32) {
    %c1_i32 = arith.constant 1 : i32
    %0 = arith.addi %arg1, %c1_i32 : i32
    %c2_i32 = arith.constant 2 : i32
    %1 = arith.muli %0, %c2_i32 : i32
    %c1_i32_0 = arith.constant 1 : i32
    %2 = arith.minsi %1, %c1_i32_0 : i32
    %c0_i32 = arith.constant 0 : i32
    %c0_i32_1 = arith.constant 0 : i32
    %c0_i32_2 = arith.constant 0 : i32
    return %arg0, %c0_i32, %2, %c0_i32_1 : i32, i32, i32, i32
  }
  func.func @transform_2(%arg0: i32, %arg1: i32) -> (i32, i32, i32) {
    %c0_i32 = arith.constant 0 : i32
    %c0_i32_0 = arith.constant 0 : i32
    %c0_i32_1 = arith.constant 0 : i32
    return %arg0, %c0_i32, %c0_i32_0 : i32, i32, i32
  }
  func.func @transform_3(%arg0: i32, %arg1: i32) -> (i32, i32, i32) {
    %c0_i32 = arith.constant 0 : i32
    %c0_i32_0 = arith.constant 0 : i32
    %c0_i32_1 = arith.constant 0 : i32
    %c0_i32_2 = arith.constant 0 : i32
    return %c0_i32, %c0_i32_0, %c0_i32_1 : i32, i32, i32
  }
  func.func @transform_4(%arg0: i32, %arg1: i32) -> (i32, i32) {
    %c0_i32 = arith.constant 0 : i32
    %c0_i32_0 = arith.constant 0 : i32
    %c0_i32_1 = arith.constant 0 : i32
    return %c0_i32, %c0_i32_0 : i32, i32
  }
  func.func @transform_5(%arg0: i32, %arg1: i32) -> (i32, i32) {
    %c0_i32 = arith.constant 0 : i32
    %c0_i32_0 = arith.constant 0 : i32
    %c0_i32_1 = arith.constant 0 : i32
    return %c0_i32, %c0_i32_0 : i32, i32
  }
  func.func @transform_6(%arg0: i32, %arg1: i32) -> (i32, i32) {
    %c0_i32 = arith.constant 0 : i32
    %c0_i32_0 = arith.constant 0 : i32
    %c0_i32_1 = arith.constant 0 : i32
    return %c0_i32, %c0_i32_0 : i32, i32
  }
  func.func @transform_7(%arg0: i32, %arg1: i32) -> (i32, i32) {
    %c0_i32 = arith.constant 0 : i32
    %c0_i32_0 = arith.constant 0 : i32
    %c0_i32_1 = arith.constant 0 : i32
    return %c0_i32, %c0_i32_0 : i32, i32
  }
  func.func @transform_8(%arg0: i32, %arg1: i32) -> (i32, i32) {
    %c0_i32 = arith.constant 0 : i32
    %c0_i32_0 = arith.constant 0 : i32
    %c0_i32_1 = arith.constant 0 : i32
    return %c0_i32, %c0_i32_0 : i32, i32
  }
  func.func @transform_9(%arg0: i32, %arg1: i32) -> (i32, i32, i32) {
    %c0_i32 = arith.constant 0 : i32
    %c0_i32_0 = arith.constant 0 : i32
    %c0_i32_1 = arith.constant 0 : i32
    return %arg0, %c0_i32, %c0_i32_0 : i32, i32, i32
  }
}

module attributes {stable_mosaic.version = 11 : i64} {
  func.func @_conv_pool_kernel(%arg0: i32, %arg1: i32, %arg2: memref<1x2x16x32xbf16, #tpu.memory_space<vmem>>, %arg3: memref<1x2x8x32xbf16, #tpu.memory_space<vmem>>, %arg4: memref<1x2x1xf32, #tpu.memory_space<vmem>>, %arg5: memref<7x32x32xbf16, #tpu.memory_space<vmem>>, %arg6: memref<1x32xf32, #tpu.memory_space<vmem>>, %arg7: memref<32x128xf32, #tpu.memory_space<vmem>>, %arg8: memref<1x128xf32, #tpu.memory_space<vmem>>, %arg9: memref<128x128xf32, #tpu.memory_space<vmem>>, %arg10: memref<1x128xf32, #tpu.memory_space<vmem>>, %arg11: memref<1x2x128xf32, #tpu.memory_space<vmem>>, %arg12: memref<2x32xf32, #tpu.memory_space<vmem>>) attributes {dimension_semantics = [#tpu.dimension_semantics<parallel>, #tpu.dimension_semantics<arbitrary>], iteration_bounds = array<i64: 2, 1>, scalar_prefetch = 0 : i64, scratch_operands = 1 : i64, tpu.core_type = #tpu.core_type<tc>, window_params = [{transform_indices = @transform_0, window_bounds = array<i64: 1, 2, 16, 32>}, {transform_indices = @transform_1, window_bounds = array<i64: 1, 2, 8, 32>}, {transform_indices = @transform_2, window_bounds = array<i64: 1, 2, 1>}, {pipeline_mode = #tpu.pipeline_mode<synchronous>, transform_indices = @transform_3, window_bounds = array<i64: 7, 32, 32>}, {pipeline_mode = #tpu.pipeline_mode<synchronous>, transform_indices = @transform_4, window_bounds = array<i64: 1, 32>}, {pipeline_mode = #tpu.pipeline_mode<synchronous>, transform_indices = @transform_5, window_bounds = array<i64: 32, 128>}, {pipeline_mode = #tpu.pipeline_mode<synchronous>, transform_indices = @transform_6, window_bounds = array<i64: 1, 128>}, {pipeline_mode = #tpu.pipeline_mode<synchronous>, transform_indices = @transform_7, window_bounds = array<i64: 128, 128>}, {pipeline_mode = #tpu.pipeline_mode<synchronous>, transform_indices = @transform_8, window_bounds = array<i64: 1, 128>}, {transform_indices = @transform_9, window_bounds = array<i64: 1, 2, 128>}]} {
    %c0_i32 = arith.constant 0 : i32
    %0 = arith.cmpi eq, %arg1, %c0_i32 : i32
    %1 = arith.extui %0 : i1 to i32
    %c0_i32_0 = arith.constant 0 : i32
    %2 = arith.cmpi ne, %1, %c0_i32_0 : i32
    scf.if %2 {
      %cst = arith.constant 0.000000e+00 : f32
      %10 = vector.broadcast %cst : f32 to vector<2x32xf32>
      %c0 = arith.constant 0 : index
      %c0_4 = arith.constant 0 : index
      %11 = vector.load %arg12[%c0, %c0_4] : memref<2x32xf32, #tpu.memory_space<vmem>>, vector<2x32xf32>
      tpu.vector_store %arg12[%c0, %c0_4], %10 {strides = array<i32>} : memref<2x32xf32, #tpu.memory_space<vmem>>, vector<2x32xf32>,
    } else {
    }
    %c16_i32 = arith.constant 16 : i32
    %3 = arith.muli %arg1, %c16_i32 : i32
    %c10_i32 = arith.constant 10 : i32
    %4 = arith.cmpi slt, %3, %c10_i32 : i32
    %5 = arith.extui %4 : i1 to i32
    %c0_i32_1 = arith.constant 0 : i32
    %6 = arith.cmpi ne, %5, %c0_i32_1 : i32
    scf.if %6 {
      %c0 = arith.constant 0 : index
      %c0_4 = arith.constant 0 : index
      %c0_5 = arith.constant 0 : index
      %c0_6 = arith.constant 0 : index
      %10 = vector.load %arg2[%c0, %c0_4, %c0_5, %c0_6] : memref<1x2x16x32xbf16, #tpu.memory_space<vmem>>, vector<1x2x16x32xbf16>
      %11 = vector.shape_cast %10 : vector<1x2x16x32xbf16> to vector<2x16x32xbf16>
      %c0_7 = arith.constant 0 : index
      %c0_8 = arith.constant 0 : index
      %c0_9 = arith.constant 0 : index
      %c0_10 = arith.constant 0 : index
      %12 = vector.load %arg3[%c0_7, %c0_8, %c0_9, %c0_10] : memref<1x2x8x32xbf16, #tpu.memory_space<vmem>>, vector<1x2x8x32xbf16>
      %13 = vector.shape_cast %12 : vector<1x2x8x32xbf16> to vector<2x8x32xbf16>
      %14 = tpu.concatenate %11, %13 in 1 : vector<2x16x32xbf16>, vector<2x8x32xbf16> -> vector<2x24x32xbf16>
      %cst = arith.constant 0.000000e+00 : f32
      %15 = vector.broadcast %cst : f32 to vector<2x16x32xf32>
      %16 = vector.extract_strided_slice %14 {offsets = [0, 0, 0], sizes = [2, 16, 32], strides = [1, 1, 1]} : vector<2x24x32xbf16> to vector<2x16x32xbf16>
      %c0_11 = arith.constant 0 : index
      %c0_12 = arith.constant 0 : index
      %c0_13 = arith.constant 0 : index
      %17 = vector.load %arg5[%c0_11, %c0_12, %c0_13] : memref<7x32x32xbf16, #tpu.memory_space<vmem>>, vector<1x32x32xbf16>
      %18 = vector.shape_cast %17 : vector<1x32x32xbf16> to vector<32x32xbf16>
      %cst_14 = arith.constant dense<0.000000e+00> : vector<2x16x32xf32>
      %19 = tpu.matmul %16, %18, %cst_14 {dimension_numbers = #tpu.dot_dimension_numbers<[2], [0], [0, 1], [1], [0, 0, 0, 1, 1, 1], [], []>} : vector<2x16x32xbf16>, vector<32x32xbf16>, vector<2x16x32xf32> -> vector<2x16x32xf32>
      %20 = arith.addf %15, %19 : vector<2x16x32xf32>
      %21 = vector.extract_strided_slice %14 {offsets = [0, 1, 0], sizes = [2, 16, 32], strides = [1, 1, 1]} : vector<2x24x32xbf16> to vector<2x16x32xbf16>
      %c1 = arith.constant 1 : index
      %c0_15 = arith.constant 0 : index
      %c0_16 = arith.constant 0 : index
      %22 = vector.load %arg5[%c1, %c0_15, %c0_16] : memref<7x32x32xbf16, #tpu.memory_space<vmem>>, vector<1x32x32xbf16>
      %23 = vector.shape_cast %22 : vector<1x32x32xbf16> to vector<32x32xbf16>
      %cst_17 = arith.constant dense<0.000000e+00> : vector<2x16x32xf32>
      %24 = tpu.matmul %21, %23, %cst_17 {dimension_numbers = #tpu.dot_dimension_numbers<[2], [0], [0, 1], [1], [0, 0, 0, 1, 1, 1], [], []>} : vector<2x16x32xbf16>, vector<32x32xbf16>, vector<2x16x32xf32> -> vector<2x16x32xf32>
      %25 = arith.addf %20, %24 : vector<2x16x32xf32>
      %26 = vector.extract_strided_slice %14 {offsets = [0, 2, 0], sizes = [2, 16, 32], strides = [1, 1, 1]} : vector<2x24x32xbf16> to vector<2x16x32xbf16>
      %c2 = arith.constant 2 : index
      %c0_18 = arith.constant 0 : index
      %c0_19 = arith.constant 0 : index
      %27 = vector.load %arg5[%c2, %c0_18, %c0_19] : memref<7x32x32xbf16, #tpu.memory_space<vmem>>, vector<1x32x32xbf16>
      %28 = vector.shape_cast %27 : vector<1x32x32xbf16> to vector<32x32xbf16>
      %cst_20 = arith.constant dense<0.000000e+00> : vector<2x16x32xf32>
      %29 = tpu.matmul %26, %28, %cst_20 {dimension_numbers = #tpu.dot_dimension_numbers<[2], [0], [0, 1], [1], [0, 0, 0, 1, 1, 1], [], []>} : vector<2x16x32xbf16>, vector<32x32xbf16>, vector<2x16x32xf32> -> vector<2x16x32xf32>
      %30 = arith.addf %25, %29 : vector<2x16x32xf32>
      %31 = vector.extract_strided_slice %14 {offsets = [0, 3, 0], sizes = [2, 16, 32], strides = [1, 1, 1]} : vector<2x24x32xbf16> to vector<2x16x32xbf16>
      %c3 = arith.constant 3 : index
      %c0_21 = arith.constant 0 : index
      %c0_22 = arith.constant 0 : index
      %32 = vector.load %arg5[%c3, %c0_21, %c0_22] : memref<7x32x32xbf16, #tpu.memory_space<vmem>>, vector<1x32x32xbf16>
      %33 = vector.shape_cast %32 : vector<1x32x32xbf16> to vector<32x32xbf16>
      %cst_23 = arith.constant dense<0.000000e+00> : vector<2x16x32xf32>
      %34 = tpu.matmul %31, %33, %cst_23 {dimension_numbers = #tpu.dot_dimension_numbers<[2], [0], [0, 1], [1], [0, 0, 0, 1, 1, 1], [], []>} : vector<2x16x32xbf16>, vector<32x32xbf16>, vector<2x16x32xf32> -> vector<2x16x32xf32>
      %35 = arith.addf %30, %34 : vector<2x16x32xf32>
      %36 = vector.extract_strided_slice %14 {offsets = [0, 4, 0], sizes = [2, 16, 32], strides = [1, 1, 1]} : vector<2x24x32xbf16> to vector<2x16x32xbf16>
      %c4 = arith.constant 4 : index
      %c0_24 = arith.constant 0 : index
      %c0_25 = arith.constant 0 : index
      %37 = vector.load %arg5[%c4, %c0_24, %c0_25] : memref<7x32x32xbf16, #tpu.memory_space<vmem>>, vector<1x32x32xbf16>
      %38 = vector.shape_cast %37 : vector<1x32x32xbf16> to vector<32x32xbf16>
      %cst_26 = arith.constant dense<0.000000e+00> : vector<2x16x32xf32>
      %39 = tpu.matmul %36, %38, %cst_26 {dimension_numbers = #tpu.dot_dimension_numbers<[2], [0], [0, 1], [1], [0, 0, 0, 1, 1, 1], [], []>} : vector<2x16x32xbf16>, vector<32x32xbf16>, vector<2x16x32xf32> -> vector<2x16x32xf32>
      %40 = arith.addf %35, %39 : vector<2x16x32xf32>
      %41 = vector.extract_strided_slice %14 {offsets = [0, 5, 0], sizes = [2, 16, 32], strides = [1, 1, 1]} : vector<2x24x32xbf16> to vector<2x16x32xbf16>
      %c5 = arith.constant 5 : index
      %c0_27 = arith.constant 0 : index
      %c0_28 = arith.constant 0 : index
      %42 = vector.load %arg5[%c5, %c0_27, %c0_28] : memref<7x32x32xbf16, #tpu.memory_space<vmem>>, vector<1x32x32xbf16>
      %43 = vector.shape_cast %42 : vector<1x32x32xbf16> to vector<32x32xbf16>
      %cst_29 = arith.constant dense<0.000000e+00> : vector<2x16x32xf32>
      %44 = tpu.matmul %41, %43, %cst_29 {dimension_numbers = #tpu.dot_dimension_numbers<[2], [0], [0, 1], [1], [0, 0, 0, 1, 1, 1], [], []>} : vector<2x16x32xbf16>, vector<32x32xbf16>, vector<2x16x32xf32> -> vector<2x16x32xf32>
      %45 = arith.addf %40, %44 : vector<2x16x32xf32>
      %46 = vector.extract_strided_slice %14 {offsets = [0, 6, 0], sizes = [2, 16, 32], strides = [1, 1, 1]} : vector<2x24x32xbf16> to vector<2x16x32xbf16>
      %c6 = arith.constant 6 : index
      %c0_30 = arith.constant 0 : index
      %c0_31 = arith.constant 0 : index
      %47 = vector.load %arg5[%c6, %c0_30, %c0_31] : memref<7x32x32xbf16, #tpu.memory_space<vmem>>, vector<1x32x32xbf16>
      %48 = vector.shape_cast %47 : vector<1x32x32xbf16> to vector<32x32xbf16>
      %cst_32 = arith.constant dense<0.000000e+00> : vector<2x16x32xf32>
      %49 = tpu.matmul %46, %48, %cst_32 {dimension_numbers = #tpu.dot_dimension_numbers<[2], [0], [0, 1], [1], [0, 0, 0, 1, 1, 1], [], []>} : vector<2x16x32xbf16>, vector<32x32xbf16>, vector<2x16x32xf32> -> vector<2x16x32xf32>
      %50 = arith.addf %45, %49 : vector<2x16x32xf32>
      %c0_33 = arith.constant 0 : index
      %c0_34 = arith.constant 0 : index
      %51 = vector.load %arg6[%c0_33, %c0_34] : memref<1x32xf32, #tpu.memory_space<vmem>>, vector<1x32xf32>
      %52 = vector.shape_cast %51 : vector<1x32xf32> to vector<1x1x32xf32>
      %53 = vector.broadcast %52 : vector<1x1x32xf32> to vector<2x16x32xf32>
      %54 = arith.addf %50, %53 : vector<2x16x32xf32>
      %cst_35 = arith.constant 0.000000e+00 : f32
      %55 = vector.broadcast %cst_35 : f32 to vector<2x16x32xf32>
      %56 = arith.maximumf %54, %55 : vector<2x16x32xf32>
      %c1_i32 = arith.constant 1 : i32
      %57 = arith.addi %arg1, %c1_i32 : i32
      %c16_i32_36 = arith.constant 16 : i32
      %58 = arith.muli %57, %c16_i32_36 : i32
      %c10_i32_37 = arith.constant 10 : i32
      %59 = arith.cmpi sgt, %58, %c10_i32_37 : i32
      %true = arith.constant true
      %60 = arith.xori %59, %true : i1
      %61 = arith.extui %60 : i1 to i32
      %c0_i32_38 = arith.constant 0 : i32
      %62 = arith.cmpi ne, %61, %c0_i32_38 : i32
      scf.if %62 {
        %c0_40 = arith.constant 0 : index
        %c0_41 = arith.constant 0 : index
        %65 = vector.load %arg12[%c0_40, %c0_41] : memref<2x32xf32, #tpu.memory_space<vmem>>, vector<2x32xf32>
        %cst_42 = arith.constant dense<0.000000e+00> : vector<2x32xf32>
        %66 = vector.multi_reduction <add>, %56, %cst_42 [1] : vector<2x16x32xf32> to vector<2x32xf32>
        %67 = arith.addf %65, %66 : vector<2x32xf32>
        %c0_43 = arith.constant 0 : index
        %c0_44 = arith.constant 0 : index
        %68 = vector.load %arg12[%c0_43, %c0_44] : memref<2x32xf32, #tpu.memory_space<vmem>>, vector<2x32xf32>
        tpu.vector_store %arg12[%c0_43, %c0_44], %67 {strides = array<i32>} : memref<2x32xf32, #tpu.memory_space<vmem>>, vector<2x32xf32>,
      } else {
      }
      %63 = arith.extui %59 : i1 to i32
      %c0_i32_39 = arith.constant 0 : i32
      %64 = arith.cmpi ne, %63, %c0_i32_39 : i32
      scf.if %64 {
        %c16_i32_40 = arith.constant 16 : i32
        %65 = arith.muli %arg1, %c16_i32_40 : i32
        %66 = tpu.iota {dimensions = array<i32: 1>} : vector<1x16x1xi32>
        %67 = vector.broadcast %65 : i32 to vector<1x16x1xi32>
        %68 = arith.addi %67, %66 : vector<1x16x1xi32>
        %c0_41 = arith.constant 0 : index
        %c0_42 = arith.constant 0 : index
        %69 = vector.load %arg12[%c0_41, %c0_42] : memref<2x32xf32, #tpu.memory_space<vmem>>, vector<2x32xf32>
        %c10_i32_43 = arith.constant 10 : i32
        %70 = vector.broadcast %c10_i32_43 : i32 to vector<1x16x1xi32>
        %71 = arith.cmpi slt, %68, %70 : vector<1x16x1xi32>
        %cst_44 = arith.constant 0.000000e+00 : f32
        %72 = vector.shape_cast %71 : vector<1x16x1xi1> to vector<1x16x1xi1>
        %73 = vector.broadcast %72 : vector<1x16x1xi1> to vector<2x16x32xi1>
        %74 = vector.broadcast %cst_44 : f32 to vector<2x16x32xf32>
        %75 = arith.select %73, %56, %74 : vector<2x16x32xi1>, vector<2x16x32xf32>
        %cst_45 = arith.constant dense<0.000000e+00> : vector<2x32xf32>
        %76 = vector.multi_reduction <add>, %75, %cst_45 [1] : vector<2x16x32xf32> to vector<2x32xf32>
        %77 = arith.addf %69, %76 : vector<2x32xf32>
        %c0_46 = arith.constant 0 : index
        %c0_47 = arith.constant 0 : index
        %78 = vector.load %arg12[%c0_46, %c0_47] : memref<2x32xf32, #tpu.memory_space<vmem>>, vector<2x32xf32>
        tpu.vector_store %arg12[%c0_46, %c0_47], %77 {strides = array<i32>} : memref<2x32xf32, #tpu.memory_space<vmem>>, vector<2x32xf32>,
      } else {
      }
    } else {
    }
    %c0_i32_2 = arith.constant 0 : i32
    %7 = arith.cmpi eq, %arg1, %c0_i32_2 : i32
    %8 = arith.extui %7 : i1 to i32
    %c0_i32_3 = arith.constant 0 : i32
    %9 = arith.cmpi ne, %8, %c0_i32_3 : i32
    scf.if %9 {
      %c0 = arith.constant 0 : index
      %c0_4 = arith.constant 0 : index
      %10 = vector.load %arg12[%c0, %c0_4] : memref<2x32xf32, #tpu.memory_space<vmem>>, vector<2x32xf32>
      %c0_5 = arith.constant 0 : index
      %c0_6 = arith.constant 0 : index
      %c0_7 = arith.constant 0 : index
      %11 = vector.load %arg4[%c0_5, %c0_6, %c0_7] : memref<1x2x1xf32, #tpu.memory_space<vmem>>, vector<1x2x1xf32>
      %12 = vector.shape_cast %11 : vector<1x2x1xf32> to vector<2x1xf32>
      %13 = vector.broadcast %12 : vector<2x1xf32> to vector<2x32xf32>
      %14 = arith.mulf %10, %13 : vector<2x32xf32>
      %c0_8 = arith.constant 0 : index
      %c0_9 = arith.constant 0 : index
      %15 = vector.load %arg7[%c0_8, %c0_9] : memref<32x128xf32, #tpu.memory_space<vmem>>, vector<32x128xf32>
      %cst = arith.constant dense<0.000000e+00> : vector<2x128xf32>
      %16 = tpu.matmul %14, %15, %cst {dimension_numbers = #tpu.dot_dimension_numbers<[1], [0], [0], [1], [0, 0, 1, 1], [], []>} : vector<2x32xf32>, vector<32x128xf32>, vector<2x128xf32> -> vector<2x128xf32>
      %c0_10 = arith.constant 0 : index
      %c0_11 = arith.constant 0 : index
      %17 = vector.load %arg8[%c0_10, %c0_11] : memref<1x128xf32, #tpu.memory_space<vmem>>, vector<1x128xf32>
      %18 = vector.broadcast %17 : vector<1x128xf32> to vector<2x128xf32>
      %19 = arith.addf %16, %18 : vector<2x128xf32>
      %cst_12 = arith.constant 0.000000e+00 : f32
      %20 = vector.broadcast %cst_12 : f32 to vector<2x128xf32>
      %21 = arith.maximumf %19, %20 : vector<2x128xf32>
      %c0_13 = arith.constant 0 : index
      %c0_14 = arith.constant 0 : index
      %22 = vector.load %arg9[%c0_13, %c0_14] : memref<128x128xf32, #tpu.memory_space<vmem>>, vector<128x128xf32>
      %cst_15 = arith.constant dense<0.000000e+00> : vector<2x128xf32>
      %23 = tpu.matmul %21, %22, %cst_15 {dimension_numbers = #tpu.dot_dimension_numbers<[1], [0], [0], [1], [0, 0, 1, 1], [], []>} : vector<2x128xf32>, vector<128x128xf32>, vector<2x128xf32> -> vector<2x128xf32>
      %c0_16 = arith.constant 0 : index
      %c0_17 = arith.constant 0 : index
      %24 = vector.load %arg10[%c0_16, %c0_17] : memref<1x128xf32, #tpu.memory_space<vmem>>, vector<1x128xf32>
      %25 = vector.broadcast %24 : vector<1x128xf32> to vector<2x128xf32>
      %26 = arith.addf %23, %25 : vector<2x128xf32>
      %c0_18 = arith.constant 0 : index
      %c0_19 = arith.constant 0 : index
      %c0_20 = arith.constant 0 : index
      %27 = vector.load %arg11[%c0_18, %c0_19, %c0_20] : memref<1x2x128xf32, #tpu.memory_space<vmem>>, vector<1x2x128xf32>
      %28 = vector.shape_cast %27 : vector<1x2x128xf32> to vector<2x128xf32>
      %29 = vector.shape_cast %26 : vector<2x128xf32> to vector<1x2x128xf32>
      tpu.vector_store %arg11[%c0_18, %c0_19, %c0_20], %29 {strides = array<i32>} : memref<1x2x128xf32, #tpu.memory_space<vmem>>, vector<1x2x128xf32>,
    } else {
    }
    return
  }
  func.func @transform_0(%arg0: i32, %arg1: i32) -> (i32, i32, i32, i32) {
    %c0_i32 = arith.constant 0 : i32
    %c0_i32_0 = arith.constant 0 : i32
    %c0_i32_1 = arith.constant 0 : i32
    return %arg0, %c0_i32, %arg1, %c0_i32_0 : i32, i32, i32, i32
  }
  func.func @transform_1(%arg0: i32, %arg1: i32) -> (i32, i32, i32, i32) {
    %c1_i32 = arith.constant 1 : i32
    %0 = arith.addi %arg1, %c1_i32 : i32
    %c2_i32 = arith.constant 2 : i32
    %1 = arith.muli %0, %c2_i32 : i32
    %c1_i32_0 = arith.constant 1 : i32
    %2 = arith.minsi %1, %c1_i32_0 : i32
    %c0_i32 = arith.constant 0 : i32
    %c0_i32_1 = arith.constant 0 : i32
    %c0_i32_2 = arith.constant 0 : i32
    return %arg0, %c0_i32, %2, %c0_i32_1 : i32, i32, i32, i32
  }
  func.func @transform_2(%arg0: i32, %arg1: i32) -> (i32, i32, i32) {
    %c0_i32 = arith.constant 0 : i32
    %c0_i32_0 = arith.constant 0 : i32
    %c0_i32_1 = arith.constant 0 : i32
    return %arg0, %c0_i32, %c0_i32_0 : i32, i32, i32
  }
  func.func @transform_3(%arg0: i32, %arg1: i32) -> (i32, i32, i32) {
    %c0_i32 = arith.constant 0 : i32
    %c0_i32_0 = arith.constant 0 : i32
    %c0_i32_1 = arith.constant 0 : i32
    %c0_i32_2 = arith.constant 0 : i32
    return %c0_i32, %c0_i32_0, %c0_i32_1 : i32, i32, i32
  }
  func.func @transform_4(%arg0: i32, %arg1: i32) -> (i32, i32) {
    %c0_i32 = arith.constant 0 : i32
    %c0_i32_0 = arith.constant 0 : i32
    %c0_i32_1 = arith.constant 0 : i32
    return %c0_i32, %c0_i32_0 : i32, i32
  }
  func.func @transform_5(%arg0: i32, %arg1: i32) -> (i32, i32) {
    %c0_i32 = arith.constant 0 : i32
    %c0_i32_0 = arith.constant 0 : i32
    %c0_i32_1 = arith.constant 0 : i32
    return %c0_i32, %c0_i32_0 : i32, i32
  }
  func.func @transform_6(%arg0: i32, %arg1: i32) -> (i32, i32) {
    %c0_i32 = arith.constant 0 : i32
    %c0_i32_0 = arith.constant 0 : i32
    %c0_i32_1 = arith.constant 0 : i32
    return %c0_i32, %c0_i32_0 : i32, i32
  }
  func.func @transform_7(%arg0: i32, %arg1: i32) -> (i32, i32) {
    %c0_i32 = arith.constant 0 : i32
    %c0_i32_0 = arith.constant 0 : i32
    %c0_i32_1 = arith.constant 0 : i32
    return %c0_i32, %c0_i32_0 : i32, i32
  }
  func.func @transform_8(%arg0: i32, %arg1: i32) -> (i32, i32) {
    %c0_i32 = arith.constant 0 : i32
    %c0_i32_0 = arith.constant 0 : i32
    %c0_i32_1 = arith.constant 0 : i32
    return %c0_i32, %c0_i32_0 : i32, i32
  }
  func.func @transform_9(%arg0: i32, %arg1: i32) -> (i32, i32, i32) {
    %c0_i32 = arith.constant 0 : i32
    %c0_i32_0 = arith.constant 0 : i32
    %c0_i32_1 = arith.constant 0 : i32
    return %arg0, %c0_i32, %c0_i32_0 : i32, i32, i32
  }
}

</mosaic_0001>

<llo_original>
// kernel: tpu_custom_call.1
$region0: #{tpu_custom_call.1}
  #allocation0 [shape = 'u32[]', space=smem, size = 0x4, offset = 0x4, fixed_abs, tag = 'smem constant byte address 0x4 - core index']
  #allocation1 [shape = 'u32[72,128]{1,0:T(1,128)}', space=vmem, size = 0x9000, scoped, tag = 'internal scratch']
  #allocation2 [shape = 'f32[2,32]{1,0:T(2,128)}', space=vmem, size = 0x400, scoped, tag = 'scratch operand']
  %s0 = inlined_call_operand.hbm [shape: bf16[2,2,16,32], index: 0, kind: input, shape index: {}]
  %s1 = inlined_call_operand.hbm [shape: bf16[2,2,16,32], index: 1, kind: input, shape index: {}]
  %s2 = inlined_call_operand.vmem [shape: f32[2,2,1], index: 2, kind: input, shape index: {}]
  %s3 = inlined_call_operand.hbm [shape: bf16[7,32,32], index: 3, kind: input, shape index: {}]
  %s4 = inlined_call_operand.vmem [shape: f32[1,32], index: 4, kind: input, shape index: {}]
  %s5 = inlined_call_operand.hbm [shape: f32[32,128], index: 5, kind: input, shape index: {}]
  %s6 = inlined_call_operand.vmem [shape: f32[1,128], index: 6, kind: input, shape index: {}]
  %s7 = inlined_call_operand.hbm [shape: f32[128,128], index: 7, kind: input, shape index: {}]
  %s8 = inlined_call_operand.vmem [shape: f32[1,128], index: 8, kind: input, shape index: {}]
  %s9 = inlined_call_operand.hbm [shape: f32[2,2,128], index: 9, kind: output, shape index: {}]
  %s10 = sld [smem:[#allocation0]]
  $region109: #{tpu_custom_call.1} parent=0
    _
  %s12 = ssub.s32 1, %s10
  %s13 = scalar_select 0, %s12, %s10
  $region1: #{tpu_custom_call.1} parent=0
    #allocation3 [shape = 'u8[16384]{0}', space=vmem, size = 0x4000, scoped, tag = 'input window, operand 0']
    #allocation4 [shape = 's32[2]{0}', space=sflag, size = 0x8, scoped, tag = 'scoped memory for tpu_custom_call.1']
    #allocation5 [shape = 's32[2]{0}', space=sflag, size = 0x8, scoped, tag = 'scoped memory for tpu_custom_call.1']
    #allocation6 [shape = 'u8[8192]{0}', space=vmem, size = 0x2000, scoped, tag = 'input window, operand 1']
    #allocation7 [shape = 's32[2]{0}', space=sflag, size = 0x8, scoped, tag = 'scoped memory for tpu_custom_call.1']
    #allocation8 [shape = 'u8[57344]{0}', space=vmem, size = 0xe000, scoped, tag = 'input window, operand 3, single buffered']
    #allocation9 [shape = 'u8[16384]{0}', space=vmem, size = 0x4000, scoped, tag = 'input window, operand 5, single buffered']
    #allocation10 [shape = 's32[1]{0}', space=sflag, size = 0x4, scoped, tag = 'scoped memory for tpu_custom_call.1']
    #allocation11 [shape = 'u8[65536]{0}', space=vmem, size = 0x10000, scoped, tag = 'input window, operand 7, single buffered']
    #allocation12 [shape = 'u8[2048]{0}', space=vmem, size = 0x800, scoped, tag = 'output window, operand 0']
    %14 = vsyncpa [#allocation4], 0
    %s15 = scalar_lea.sflag [#allocation4], 1
    %16 = vsyncpa %s15, 0
    %17 = vsyncpa [#allocation7], 0
    %s18 = scalar_lea.sflag [#allocation7], 1
    %19 = vsyncpa %s18, 0
    %20 = vsyncpa [#allocation10], 0
    %21 = vsyncpa [#allocation5], 0
    %s22 = scalar_lea.sflag [#allocation5], 1
    %23 = vsyncpa %s22, 0
    loop: start=0, step=1, limit=4
    $region2: #{tpu_custom_call.1} parent=1 // loop_pre_header
      _
    $region3: #{tpu_custom_call.1} parent=1 // loop_header
      %s25 = sphi 0, %s29
      %p26 = scmp.ge.s32.totalorder %s25, 4
      %s32 = sphi 0, %s44
      %s33 = sphi 0, %s40
      %s34 = sphi 0, %s32
      %s35 = sphi 0, %s33
      %s36 = sphi 0, %s34
      %s37 = sphi 0, %s35
      %s49 = sphi 0, %s51
      %s52 = sphi 0, %s49
      %s53 = sphi 0, %s52
      %s69 = sphi 0, %s53
      %s85 = sphi 0, %s87
      %s88 = sphi 0, %s85
      %s89 = sphi 0, %s88
      %s105 = sphi 0, %s89
      %s111 = sphi 0, %s113
      %s114 = sphi 0, %s111
      %s115 = sphi 0, %s114
      %s131 = sphi 0, %s115
      %s135 = sphi 0, %s135
      %s137 = sphi 0, %s135
      %s138 = sphi 0, %s137
      %s152 = sphi 0, %s138
      %s156 = sphi 0, %s156
      %s158 = sphi 0, %s156
      %s159 = sphi 0, %s158
      %s173 = sphi 0, %s159
      %s177 = sphi 0, %s177
      %s179 = sphi 0, %s177
      %s180 = sphi 0, %s179
      %s194 = sphi 0, %s180
      %s198 = sphi 0, %s198
      %s200 = sphi 0, %s198
      %s201 = sphi 0, %s200
      %s215 = sphi 0, %s201
      %s219 = sphi 0, %s219
      %s221 = sphi 0, %s219
      %s222 = sphi 0, %s221
      %s236 = sphi 0, %s222
      %s240 = sphi 0, %s240
      %s242 = sphi 0, %s240
      %s243 = sphi 0, %s242
      %s257 = sphi 0, %s243
      %s263 = sphi 0, %s265
      %s266 = sphi 0, %s263
      %s267 = sphi 0, %s266
      %s283 = sphi 0, %s267
    $region4: #{tpu_custom_call.1} parent=1 // loop_header_branch
      %28 = sbr.rel (%p26) target = $region8
    $region5: #{tpu_custom_call.1} parent=1 // loop_body
      %s30 = ssub.s32 %s25, 1
      %s31 = ssub.s32 %s25, 2
      %s38 = sadd.s32 1, %s33
      %p39 = scmp.ge.s32.totalorder %s38, 1
      %s40 = scalar_select %p39, 0, %s38
      %s41 = sadd.s32 1, %s32
      %s42 = scalar_select %p39, %s41, %s32
      %p43 = scmp.ge.s32.totalorder %s42, 2
      %s44 = scalar_select %p43, 0, %s42
      %s45 = ssub.s32 %s32, %s44
      %s46 = ssub.s32 %s33, %s40
      %s47 = sor.u32 %s45, %s46
      %p48 = scmp.eq.s32.totalorder %s47, 0
      %s50 = sadd.s32 %s49, 1
      %s51 = scalar_select %p48, %s49, %s50
      %p54 = pneg %p48
      %p55 = scmp.eq.s32.totalorder %s25, 1
      %p56 = por %p54, %p55
      %p57 = scmp.ne.s32.totalorder %s49, %s52
      %p58 = scmp.eq.s32.totalorder %s25, 0
      %p59 = por %p57, %p58
      %p60 = scmp.ne.s32.totalorder %s49, %s52
      %p61 = scmp.eq.s32.totalorder %s30, 1
      %p62 = por %p60, %p61
      %p63 = scmp.ne.s32.totalorder %s52, %s53
      %p64 = scmp.eq.s32.totalorder %s30, 0
      %p65 = por %p63, %p64
      %p66 = scmp.ne.s32.totalorder %s52, %s53
      %p67 = scmp.eq.s32.totalorder %s31, 1
      %p68 = por %p66, %p67
      %p70 = scmp.ne.s32.totalorder %s53, %s69
      %p71 = scmp.eq.s32.totalorder %s31, 0
      %p72 = por %p70, %p71
      %s73 = sadd.s32 %s33, 1
      %s74 = smul.u32 %s73, 2
      %p75 = scmp.lt.s32.totalorder %s74, 1
      %s76 = scalar_select %p75, %s74, 1
      %s77 = sadd.s32 %s40, 1
      %s78 = smul.u32 %s77, 2
      %p79 = scmp.lt.s32.totalorder %s78, 1
      %s80 = scalar_select %p79, %s78, 1
      %s81 = ssub.s32 %s32, %s44
      %s82 = ssub.s32 %s76, %s80
      %s83 = sor.u32 %s81, %s82
      %p84 = scmp.eq.s32.totalorder %s83, 0
      %s86 = sadd.s32 %s85, 1
      %s87 = scalar_select %p84, %s85, %s86
      %p90 = pneg %p84
      %p91 = scmp.eq.s32.totalorder %s25, 1
      %p92 = por %p90, %p91
      %p93 = scmp.ne.s32.totalorder %s85, %s88
      %p94 = scmp.eq.s32.totalorder %s25, 0
      %p95 = por %p93, %p94
      %p96 = scmp.ne.s32.totalorder %s85, %s88
      %p97 = scmp.eq.s32.totalorder %s30, 1
      %p98 = por %p96, %p97
      %p99 = scmp.ne.s32.totalorder %s88, %s89
      %p100 = scmp.eq.s32.totalorder %s30, 0
      %p101 = por %p99, %p100
      %p102 = scmp.ne.s32.totalorder %s88, %s89
      %p103 = scmp.eq.s32.totalorder %s31, 1
      %p104 = por %p102, %p103
      %p106 = scmp.ne.s32.totalorder %s89, %s105
      %p107 = scmp.eq.s32.totalorder %s31, 0
      %p108 = por %p106, %p107
      %s109 = ssub.s32 %s32, %s44
      %p110 = scmp.eq.s32.totalorder %s109, 0
      %s112 = sadd.s32 %s111, 1
      %s113 = scalar_select %p110, %s111, %s112
      %p116 = pneg %p110
      %p117 = scmp.eq.s32.totalorder %s25, 1
      %p118 = por %p116, %p117
      %p119 = scmp.ne.s32.totalorder %s111, %s114
      %p120 = scmp.eq.s32.totalorder %s25, 0
      %p121 = por %p119, %p120
      %p122 = scmp.ne.s32.totalorder %s111, %s114
      %p123 = scmp.eq.s32.totalorder %s30, 1
      %p124 = por %p122, %p123
      %p125 = scmp.ne.s32.totalorder %s114, %s115
      %p126 = scmp.eq.s32.totalorder %s30, 0
      %p127 = por %p125, %p126
      %p128 = scmp.ne.s32.totalorder %s114, %s115
      %p129 = scmp.eq.s32.totalorder %s31, 1
      %p130 = por %p128, %p129
      %p132 = scmp.ne.s32.totalorder %s115, %s131
      %p133 = scmp.eq.s32.totalorder %s31, 0
      %p134 = por %p132, %p133
      %s136 = sadd.s32 %s135, 1
      %p139 = scmp.eq.s32.totalorder %s25, 1
      %p140 = scmp.ne.s32.totalorder %s135, %s137
      %p141 = scmp.eq.s32.totalorder %s25, 0
      %p142 = por %p140, %p141
      %p143 = scmp.ne.s32.totalorder %s135, %s137
      %p144 = scmp.eq.s32.totalorder %s30, 1
      %p145 = por %p143, %p144
      %p146 = scmp.ne.s32.totalorder %s137, %s138
      %p147 = scmp.eq.s32.totalorder %s30, 0
      %p148 = por %p146, %p147
      %p149 = scmp.ne.s32.totalorder %s137, %s138
      %p150 = scmp.eq.s32.totalorder %s31, 1
      %p151 = por %p149, %p150
      %p153 = scmp.ne.s32.totalorder %s138, %s152
      %p154 = scmp.eq.s32.totalorder %s31, 0
      %p155 = por %p153, %p154
      %s157 = sadd.s32 %s156, 1
      %p160 = scmp.eq.s32.totalorder %s25, 1
      %p161 = scmp.ne.s32.totalorder %s156, %s158
      %p162 = scmp.eq.s32.totalorder %s25, 0
      %p163 = por %p161, %p162
      %p164 = scmp.ne.s32.totalorder %s156, %s158
      %p165 = scmp.eq.s32.totalorder %s30, 1
      %p166 = por %p164, %p165
      %p167 = scmp.ne.s32.totalorder %s158, %s159
      %p168 = scmp.eq.s32.totalorder %s30, 0
      %p169 = por %p167, %p168
      %p170 = scmp.ne.s32.totalorder %s158, %s159
      %p171 = scmp.eq.s32.totalorder %s31, 1
      %p172 = por %p170, %p171
      %p174 = scmp.ne.s32.totalorder %s159, %s173
      %p175 = scmp.eq.s32.totalorder %s31, 0
      %p176 = por %p174, %p175
      %s178 = sadd.s32 %s177, 1
      %p181 = scmp.eq.s32.totalorder %s25, 1
      %p182 = scmp.ne.s32.totalorder %s177, %s179
      %p183 = scmp.eq.s32.totalorder %s25, 0
      %p184 = por %p182, %p183
      %p185 = scmp.ne.s32.totalorder %s177, %s179
      %p186 = scmp.eq.s32.totalorder %s30, 1
      %p187 = por %p185, %p186
      %p188 = scmp.ne.s32.totalorder %s179, %s180
      %p189 = scmp.eq.s32.totalorder %s30, 0
      %p190 = por %p188, %p189
      %p191 = scmp.ne.s32.totalorder %s179, %s180
      %p192 = scmp.eq.s32.totalorder %s31, 1
      %p193 = por %p191, %p192
      %p195 = scmp.ne.s32.totalorder %s180, %s194
      %p196 = scmp.eq.s32.totalorder %s31, 0
      %p197 = por %p195, %p196
      %s199 = sadd.s32 %s198, 1
      %p202 = scmp.eq.s32.totalorder %s25, 1
      %p203 = scmp.ne.s32.totalorder %s198, %s200
      %p204 = scmp.eq.s32.totalorder %s25, 0
      %p205 = por %p203, %p204
      %p206 = scmp.ne.s32.totalorder %s198, %s200
      %p207 = scmp.eq.s32.totalorder %s30, 1
      %p208 = por %p206, %p207
      %p209 = scmp.ne.s32.totalorder %s200, %s201
      %p210 = scmp.eq.s32.totalorder %s30, 0
      %p211 = por %p209, %p210
      %p212 = scmp.ne.s32.totalorder %s200, %s201
      %p213 = scmp.eq.s32.totalorder %s31, 1
      %p214 = por %p212, %p213
      %p216 = scmp.ne.s32.totalorder %s201, %s215
      %p217 = scmp.eq.s32.totalorder %s31, 0
      %p218 = por %p216, %p217
      %s220 = sadd.s32 %s219, 1
      %p223 = scmp.eq.s32.totalorder %s25, 1
      %p224 = scmp.ne.s32.totalorder %s219, %s221
      %p225 = scmp.eq.s32.totalorder %s25, 0
      %p226 = por %p224, %p225
      %p227 = scmp.ne.s32.totalorder %s219, %s221
      %p228 = scmp.eq.s32.totalorder %s30, 1
      %p229 = por %p227, %p228
      %p230 = scmp.ne.s32.totalorder %s221, %s222
      %p231 = scmp.eq.s32.totalorder %s30, 0
      %p232 = por %p230, %p231
      %p233 = scmp.ne.s32.totalorder %s221, %s222
      %p234 = scmp.eq.s32.totalorder %s31, 1
      %p235 = por %p233, %p234
      %p237 = scmp.ne.s32.totalorder %s222, %s236
      %p238 = scmp.eq.s32.totalorder %s31, 0
      %p239 = por %p237, %p238
      %s241 = sadd.s32 %s240, 1
      %p244 = scmp.eq.s32.totalorder %s25, 1
      %p245 = scmp.ne.s32.totalorder %s240, %s242
      %p246 = scmp.eq.s32.totalorder %s25, 0
      %p247 = por %p245, %p246
      %p248 = scmp.ne.s32.totalorder %s240, %s242
      %p249 = scmp.eq.s32.totalorder %s30, 1
      %p250 = por %p248, %p249
      %p251 = scmp.ne.s32.totalorder %s242, %s243
      %p252 = scmp.eq.s32.totalorder %s30, 0
      %p253 = por %p251, %p252
      %p254 = scmp.ne.s32.totalorder %s242, %s243
      %p255 = scmp.eq.s32.totalorder %s31, 1
      %p256 = por %p254, %p255
      %p258 = scmp.ne.s32.totalorder %s243, %s257
      %p259 = scmp.eq.s32.totalorder %s31, 0
      %p260 = por %p258, %p259
      %s261 = ssub.s32 %s32, %s44
      %p262 = scmp.eq.s32.totalorder %s261, 0
      %s264 = sadd.s32 %s263, 1
      %s265 = scalar_select %p262, %s263, %s264
      %p268 = pneg %p262
      %p269 = scmp.eq.s32.totalorder %s25, 1
      %p270 = por %p268, %p269
      %p271 = scmp.ne.s32.totalorder %s263, %s266
      %p272 = scmp.eq.s32.totalorder %s25, 0
      %p273 = por %p271, %p272
      %p274 = scmp.ne.s32.totalorder %s263, %s266
      %p275 = scmp.eq.s32.totalorder %s30, 1
      %p276 = por %p274, %p275
      %p277 = scmp.ne.s32.totalorder %s266, %s267
      %p278 = scmp.eq.s32.totalorder %s30, 0
      %p279 = por %p277, %p278
      %p280 = scmp.ne.s32.totalorder %s266, %s267
      %p281 = scmp.eq.s32.totalorder %s31, 1
      %p282 = por %p280, %p281
      %p284 = scmp.ne.s32.totalorder %s267, %s283
      %p285 = scmp.eq.s32.totalorder %s31, 0
      %p286 = por %p284, %p285
      %p287 = scmp.le.s32.totalorder 1, %s25
      %p288 = scmp.lt.s32.totalorder %s25, 3
      %p289 = pnand %p287, %p288
      %p290 = pneg %p289
      // Predicated region
      $region9: #{tpu_custom_call.1} parent=5 // pred_check
        _
      $region10: #{tpu_custom_call.1} parent=5 // pred_check_branch
        %292 = sbr.rel (%p289) target = $region12
      $region11: #{tpu_custom_call.1} parent=5 // pred_region
        %s293 = ssub.s32 %s25, 1
        // Predicated region
        $region13: #{tpu_custom_call.1} parent=11 // pred_check
          %p294 = pneg %p148
        $region14: #{tpu_custom_call.1} parent=11 // pred_check_branch
          %296 = sbr.rel (%p294) target = $region16
        $region15: #{tpu_custom_call.1} parent=11 // pred_region
          %298 = vsyncadd [#allocation7], 0
          %s299 = sshll.u32 %s3, 4
          %s300 = int_to_ptr.hbm [resolvable:$true] %s299
          %s301 = sshll.u32 [#allocation8], 4
          %s302 = int_to_ptr.vmem [resolvable:$true] %s301
          %307 = dma.hbm_to_vmem [thread:$0]  %s300, 1792, %s302, [#allocation7], 64, 64, 4
        $region16: #{tpu_custom_call.1} parent=11 // pred_fallthru
          _
        // Predicated region
        $region17: #{tpu_custom_call.1} parent=11 // pred_check
          %p308 = pneg %p169
        $region18: #{tpu_custom_call.1} parent=11 // pred_check_branch
          %310 = sbr.rel (%p308) target = $region20
        $region19: #{tpu_custom_call.1} parent=11 // pred_region
          _
        $region20: #{tpu_custom_call.1} parent=11 // pred_fallthru
          _
        // Predicated region
        $region21: #{tpu_custom_call.1} parent=11 // pred_check
          %p311 = pneg %p190
        $region22: #{tpu_custom_call.1} parent=11 // pred_check_branch
          %313 = sbr.rel (%p311) target = $region24
        $region23: #{tpu_custom_call.1} parent=11 // pred_region
          %315 = vsyncadd [#allocation10], 0
          %s316 = sshll.u32 %s5, 4
          %s317 = int_to_ptr.hbm [resolvable:$true] %s316
          %s318 = sshll.u32 [#allocation9], 4
          %s319 = int_to_ptr.vmem [resolvable:$true] %s318
          %324 = dma.hbm_to_vmem [thread:$0]  %s317, 512, %s319, [#allocation10], 128, 128, 8
        $region24: #{tpu_custom_call.1} parent=11 // pred_fallthru
          _
        // Predicated region
        $region25: #{tpu_custom_call.1} parent=11 // pred_check
          %p325 = pneg %p211
        $region26: #{tpu_custom_call.1} parent=11 // pred_check_branch
          %327 = sbr.rel (%p325) target = $region28
        $region27: #{tpu_custom_call.1} parent=11 // pred_region
          _
        $region28: #{tpu_custom_call.1} parent=11 // pred_fallthru
          _
        // Predicated region
        $region29: #{tpu_custom_call.1} parent=11 // pred_check
          %p328 = pneg %p232
        $region30: #{tpu_custom_call.1} parent=11 // pred_check_branch
          %330 = sbr.rel (%p328) target = $region32
        $region31: #{tpu_custom_call.1} parent=11 // pred_region
          %332 = vsyncadd [#allocation10], 0
          %s333 = sshll.u32 %s7, 4
          %s334 = int_to_ptr.hbm [resolvable:$true] %s333
          %s335 = sshll.u32 [#allocation11], 4
          %s336 = int_to_ptr.vmem [resolvable:$true] %s335
          %341 = dma.hbm_to_vmem [thread:$0]  %s334, 2048, %s336, [#allocation10], 128, 128, 8
        $region32: #{tpu_custom_call.1} parent=11 // pred_fallthru
          _
        // Predicated region
        $region33: #{tpu_custom_call.1} parent=11 // pred_check
          %p342 = pneg %p253
        $region34: #{tpu_custom_call.1} parent=11 // pred_check_branch
          %344 = sbr.rel (%p342) target = $region36
        $region35: #{tpu_custom_call.1} parent=11 // pred_region
          _
        $region36: #{tpu_custom_call.1} parent=11 // pred_fallthru
          _
      $region12: #{tpu_custom_call.1} parent=5 // pred_fallthru
        _
      %p345 = scmp.lt.s32.totalorder %s25, 2
      // Predicated region
      $region37: #{tpu_custom_call.1} parent=5 // pred_check
        %p346 = pneg %p345
      $region38: #{tpu_custom_call.1} parent=5 // pred_check_branch
        %348 = sbr.rel (%p346) target = $region40
      $region39: #{tpu_custom_call.1} parent=5 // pred_region
        // Predicated region
        $region41: #{tpu_custom_call.1} parent=39 // pred_check
          %p349 = pneg %p59
        $region42: #{tpu_custom_call.1} parent=39 // pred_check_branch
          %351 = sbr.rel (%p349) target = $region44
        $region43: #{tpu_custom_call.1} parent=39 // pred_region
          %s352 = sand.u32 %s49, 1
          %s353 = scalar_lea.sflag [#allocation4], %s352
          %s354 = sand.u32 %s49, 1
          %s355 = smul.addr %s354, 16
          %s356 = scalar_lea.vmem [#allocation3], %s355
          %s357 = smul.u32 2, %s33
          %359 = vsyncadd %s353, 0
          %s360 = smul.addr %s32, 4
          %s361 = sadd.s32 %s357, %s360
          %s362 = smul.addr %s361, 4
          %s363 = scalar_lea.hbm %s0, %s362
          %s364 = sshll.u32 %s363, 4
          %s365 = int_to_ptr.hbm [resolvable:$true] %s364
          %s366 = sshll.u32 %s356, 4
          %s367 = int_to_ptr.vmem [resolvable:$true] %s366
          %372 = dma.hbm_to_vmem [thread:$0]  %s365, 256, %s367, %s353, 64, 64, 4
        $region44: #{tpu_custom_call.1} parent=39 // pred_fallthru
          _
        // Predicated region
        $region45: #{tpu_custom_call.1} parent=39 // pred_check
          %p373 = pneg %p95
        $region46: #{tpu_custom_call.1} parent=39 // pred_check_branch
          %375 = sbr.rel (%p373) target = $region48
        $region47: #{tpu_custom_call.1} parent=39 // pred_region
          %s376 = sand.u32 %s25, 1
          %s377 = scalar_lea.sflag [#allocation7], %s376
          %s378 = sand.u32 %s85, 1
          %s379 = smul.addr %s378, 8
          %s380 = scalar_lea.vmem [#allocation6], %s379
          %s381 = sadd.s32 %s33, 1
          %s382 = smul.u32 %s381, 2
          %p383 = scmp.lt.s32.totalorder %s382, 1
          %s384 = scalar_select %p383, %s382, 1
          %386 = vsyncadd %s377, 0
          %s387 = smul.addr %s32, 4
          %s388 = sadd.s32 %s384, %s387
          %s389 = smul.addr %s388, 4
          %s390 = scalar_lea.hbm %s1, %s389
          %s391 = sshll.u32 %s390, 4
          %s392 = int_to_ptr.hbm [resolvable:$true] %s391
          %s393 = sshll.u32 %s380, 4
          %s394 = int_to_ptr.vmem [resolvable:$true] %s393
          %399 = dma.hbm_to_vmem [thread:$0]  %s392, 128, %s394, %s377, 128, 64, 4
        $region48: #{tpu_custom_call.1} parent=39 // pred_fallthru
          _
        // Predicated region
        $region49: #{tpu_custom_call.1} parent=39 // pred_check
          %p400 = pneg %p121
        $region50: #{tpu_custom_call.1} parent=39 // pred_check_branch
          %402 = sbr.rel (%p400) target = $region52
        $region51: #{tpu_custom_call.1} parent=39 // pred_region
          %p403 = scmp.lt.s32.totalorder %s32, 1
          %s404 = scalar_select %p403, %s32, 1
          %s405 = smul.addr %s404, 2
          %s406 = scalar_lea.vmem %s2, %s405
        $region52: #{tpu_custom_call.1} parent=39 // pred_fallthru
          _
      $region40: #{tpu_custom_call.1} parent=5 // pred_fallthru
        _
      %p407 = scmp.le.s32.totalorder 1, %s25
      %p408 = scmp.lt.s32.totalorder %s25, 3
      %p409 = pnand %p407, %p408
      %p410 = pneg %p409
      // Predicated region
      $region53: #{tpu_custom_call.1} parent=5 // pred_check
        _
      $region54: #{tpu_custom_call.1} parent=5 // pred_check_branch
        %412 = sbr.rel (%p409) target = $region56
      $region55: #{tpu_custom_call.1} parent=5 // pred_region
        %s413 = ssub.s32 %s25, 1
        %s414 = sand.u32 %s52, 1
        %s415 = scalar_lea.sflag [#allocation4], %s414
        %s416 = sand.u32 %s52, 1
        %s417 = smul.addr %s416, 16
        %s418 = scalar_lea.vmem [#allocation3], %s417
        // Predicated region
        $region57: #{tpu_custom_call.1} parent=55 // pred_check
          %p419 = pneg %p65
        $region58: #{tpu_custom_call.1} parent=55 // pred_check_branch
          %421 = sbr.rel (%p419) target = $region60
        $region59: #{tpu_custom_call.1} parent=55 // pred_region
          %423 = dma.done %s415, 256
        $region60: #{tpu_custom_call.1} parent=55 // pred_fallthru
          _
        %s424 = sand.u32 %s30, 1
        %s425 = scalar_lea.sflag [#allocation7], %s424
        %s426 = sand.u32 %s88, 1
        %s427 = smul.addr %s426, 8
        %s428 = scalar_lea.vmem [#allocation6], %s427
        // Predicated region
        $region61: #{tpu_custom_call.1} parent=55 // pred_check
          %p429 = pneg %p101
        $region62: #{tpu_custom_call.1} parent=55 // pred_check_branch
          %431 = sbr.rel (%p429) target = $region64
        $region63: #{tpu_custom_call.1} parent=55 // pred_region
          %433 = dma.done %s425, 128
        $region64: #{tpu_custom_call.1} parent=55 // pred_fallthru
          _
        // Predicated region
        $region65: #{tpu_custom_call.1} parent=55 // pred_check
          %p434 = pneg %p148
        $region66: #{tpu_custom_call.1} parent=55 // pred_check_branch
          %436 = sbr.rel (%p434) target = $region68
        $region67: #{tpu_custom_call.1} parent=55 // pred_region
          %438 = dma.done [#allocation7], 1792
        $region68: #{tpu_custom_call.1} parent=55 // pred_fallthru
          _
        // Predicated region
        $region69: #{tpu_custom_call.1} parent=55 // pred_check
          %p439 = pneg %p190
        $region70: #{tpu_custom_call.1} parent=55 // pred_check_branch
          %441 = sbr.rel (%p439) target = $region72
        $region71: #{tpu_custom_call.1} parent=55 // pred_region
          %443 = dma.done [#allocation10], 512
        $region72: #{tpu_custom_call.1} parent=55 // pred_fallthru
          _
        // Predicated region
        $region73: #{tpu_custom_call.1} parent=55 // pred_check
          %p444 = pneg %p232
        $region74: #{tpu_custom_call.1} parent=55 // pred_check_branch
          %446 = sbr.rel (%p444) target = $region76
        $region75: #{tpu_custom_call.1} parent=55 // pred_region
          %448 = dma.done [#allocation10], 2048
        $region76: #{tpu_custom_call.1} parent=55 // pred_fallthru
          _
        %s449 = sand.u32 %s52, 1
        %s450 = scalar_lea.sflag [#allocation4], %s449
        %s451 = sand.u32 %s52, 1
        %s452 = smul.addr %s451, 16
        %s453 = scalar_lea.vmem [#allocation3], %s452
        %p454 = pneg %p65
        %p455 = pneg %p62
        %s456 = sand.u32 %s30, 1
        %s457 = scalar_lea.sflag [#allocation7], %s456
        %s458 = sand.u32 %s88, 1
        %s459 = smul.addr %s458, 8
        %s460 = scalar_lea.vmem [#allocation6], %s459
        %p461 = pneg %p101
        %p462 = pneg %p98
        %p463 = scmp.lt.s32.totalorder %s34, 1
        %s464 = scalar_select %p463, %s34, 1
        %s465 = smul.addr %s464, 2
        %s466 = scalar_lea.vmem %s2, %s465
        %p467 = pneg %p127
        %p468 = pneg %p124
        %p469 = pneg %p148
        %p470 = pneg %p145
        %p471 = pneg %p169
        %p472 = pneg %p166
        %p473 = pneg %p190
        %p474 = pneg %p187
        %p475 = pneg %p211
        %p476 = pneg %p208
        %p477 = pneg %p232
        %p478 = pneg %p229
        %p479 = pneg %p253
        %p480 = pneg %p250
        %p481 = pneg %p279
        %p482 = pneg %p276
        %s483 = sand.u32 %s266, 1
        %s484 = scalar_lea.sflag [#allocation5], %s483
        %s485 = sand.u32 %s266, 1
        %s486 = smul.addr %s485, 2
        %s487 = scalar_lea.vmem [#allocation12], %s486
        %s488 = smul.u32 2, %s35
        %s489 = sadd.s32 %s35, 1
        %s490 = smul.u32 %s489, 2
        %p491 = scmp.lt.s32.totalorder %s490, 1
        %s492 = scalar_select %p491, %s490, 1
        %p493 = scmp.lt.s32.totalorder %s34, 1
        %s494 = scalar_select %p493, %s34, 1
        %s495 = smul.addr %s494, 2
        %s496 = scalar_lea.vmem %s2, %s495
        %p498 = scmp.eq.s32.totalorder %s35, 0
        // Predicated region
        $region77: #{tpu_custom_call.1} parent=55 // pred_check
          %p499 = pneg %p498
        $region78: #{tpu_custom_call.1} parent=55 // pred_check_branch
          %501 = sbr.rel (%p499) target = $region80
        $region79: #{tpu_custom_call.1} parent=55 // pred_region
          %vm502 = vcmask 254976
          %503 = vst.msk [vmem:[#allocation2] sm:$0x3] %vm502, 0.0
        $region80: #{tpu_custom_call.1} parent=55 // pred_fallthru
          _
        %s504 = smul.u32 %s35, 16
        %p505 = scmp.lt.s32.totalorder %s504, 10
        // Predicated region
        $region81: #{tpu_custom_call.1} parent=55 // pred_check
          %p506 = pneg %p505
        $region82: #{tpu_custom_call.1} parent=55 // pred_check_branch
          %508 = sbr.rel (%p506) target = $region84
        $region83: #{tpu_custom_call.1} parent=55 // pred_region
          %v509 = vld [vmem:[%s418] sm:$0xf]
          %v510 = vld [vmem:[%s418 + $0x4] sm:$0xf]
          %v511 = vld [vmem:[%s418 + $0x8] sm:$0xf]
          %v512 = vld [vmem:[%s418 + $0xc] sm:$0xf]
          %v513 = vld [vmem:[%s428] sm:$0xf]
          %v514 = vld [vmem:[%s428 + $0x4] sm:$0xf]
          %v519 = vunpack.c.l.b16 %v509
          %v520 = vunpack.c.l.b16 %v510
          %v521 = vunpack.c.l.b16 %v511
          %v522 = vunpack.c.l.b16 %v512
          %v523 = vpack.c.b16 %v520, %v519
          %v524 = vpack.c.b16 %v522, %v521
          %v525 = vld [vmem:[#allocation8] sm:$0xf]
          %v526 = vld [vmem:[#allocation8 + $0x4] sm:$0xf]
          %v527 = vld [vmem:[#allocation8 + $0x8] sm:$0xf]
          %v528 = vld [vmem:[#allocation8 + $0xc] sm:$0xf]
          %s529 = scalar_lea.vmem [#allocation8], 16
          %v530 = vld [vmem:[%s529] sm:$0xf]
          %v531 = vld [vmem:[%s529 + $0x4] sm:$0xf]
          %v532 = vld [vmem:[%s529 + $0x8] sm:$0xf]
          %v533 = vld [vmem:[%s529 + $0xc] sm:$0xf]
          %vm534 = vsmask.f32 7424
          %v536 = vshrl.u32 %v523, 16
          %v538 = vshll.u32 %v523, 16
          %v540 = vrot.slane %v538, 1
          %v541 = vor.u32 %v536, %v540
          %v543 = vshll.u32 %v513, 16
          %v545 = vrot.slane %v543, 1
          %v546 = vsel %vm534, %v541, %v545
          %v548 = vshrl.u32 %v524, 16
          %v550 = vshll.u32 %v524, 16
          %v552 = vrot.slane %v550, 1
          %v553 = vor.u32 %v548, %v552
          %v555 = vshll.u32 %v514, 16
          %v557 = vrot.slane %v555, 1
          %v558 = vsel %vm534, %v553, %v557
          %v563 = vunpack.c.l.b16 %v530
          %v564 = vunpack.c.l.b16 %v531
          %v565 = vunpack.c.l.b16 %v532
          %v566 = vunpack.c.l.b16 %v533
          %v567 = vpack.c.b16 %v564, %v563
          %v568 = vpack.c.b16 %v566, %v565
          %vm571 = vcmask 261120
          %v573 = vsel %vm571, %v546, 0
          %v576 = vsel %vm571, %v558, 0
          %578 = vmatpush.bf16.msra.mxu0 0
          %579 = vmatpush.bf16.msra.mxu0 0
          %580 = vmatpush.bf16.msra.mxu0 0
          %581 = vmatpush.bf16.msra.mxu0 0
          %582 = vmatpush.bf16.msra.mxu0 0
          %583 = vmatpush.bf16.msra.mxu0 0
          %584 = vmatpush.bf16.msra.mxu0 %v568
          %585 = vmatpush.bf16.msra.mxu0 %v567
          %586 = vmatmul.bf16.gmra.mxu0 %v573
          %v587 = vpop.f32.mrf.mxu0
          %v588 = vadd.f32 0.0, %v587
          %v589 = vpop.f32.mrf.mxu0
          %v590 = vadd.f32 0.0, %v589
          %591 = vmatmul.bf16.gmra.mxu0 %v576
          %v592 = vpop.f32.mrf.mxu0
          %v593 = vadd.f32 0.0, %v592
          %v594 = vpop.f32.mrf.mxu0
          %v595 = vadd.f32 0.0, %v594
          %596 = vdwg.mxu0
          %v601 = vunpack.c.l.b16 %v525
          %v602 = vunpack.c.l.b16 %v526
          %v603 = vunpack.c.l.b16 %v527
          %v604 = vunpack.c.l.b16 %v528
          %v605 = vpack.c.b16 %v602, %v601
          %v606 = vpack.c.b16 %v604, %v603
          %v609 = vsel %vm571, %v523, 0
          %v611 = vsel %vm571, %v524, 0
          %613 = vmatpush.bf16.msra.mxu0 0
          %614 = vmatpush.bf16.msra.mxu0 0
          %615 = vmatpush.bf16.msra.mxu0 0
          %616 = vmatpush.bf16.msra.mxu0 0
          %617 = vmatpush.bf16.msra.mxu0 0
          %618 = vmatpush.bf16.msra.mxu0 0
          %619 = vmatpush.bf16.msra.mxu0 %v606
          %620 = vmatpush.bf16.msra.mxu0 %v605
          %621 = vmatmul.bf16.gmra.mxu0 %v609
          %v622 = vpop.f32.mrf.mxu0
          %v623 = vadd.f32 %v588, %v622
          %v624 = vpop.f32.mrf.mxu0
          %v625 = vadd.f32 %v590, %v624
          %626 = vmatmul.bf16.gmra.mxu0 %v611
          %v627 = vpop.f32.mrf.mxu0
          %v628 = vadd.f32 %v593, %v627
          %v629 = vpop.f32.mrf.mxu0
          %v630 = vadd.f32 %v595, %v629
          %631 = vdwg.mxu0
          %s632 = scalar_lea.vmem [#allocation8], 32
          %v633 = vld [vmem:[%s632] sm:$0xf]
          %v634 = vld [vmem:[%s632 + $0x4] sm:$0xf]
          %v635 = vld [vmem:[%s632 + $0x8] sm:$0xf]
          %v636 = vld [vmem:[%s632 + $0xc] sm:$0xf]
          %vm639 = vcmask 1046528
          %v640 = vrot.slane %v523, 1
          %v641 = vrot.slane %v513, 1
          %v642 = vsel %vm639, %v640, %v641
          %v643 = vrot.slane %v524, 1
          %v644 = vrot.slane %v514, 1
          %v645 = vsel %vm639, %v643, %v644
          %v650 = vunpack.c.l.b16 %v633
          %v651 = vunpack.c.l.b16 %v634
          %v652 = vunpack.c.l.b16 %v635
          %v653 = vunpack.c.l.b16 %v636
          %v654 = vpack.c.b16 %v651, %v650
          %v655 = vpack.c.b16 %v653, %v652
          %v659 = vsel %vm571, %v642, 0
          %v662 = vsel %vm571, %v645, 0
          %664 = vmatpush.bf16.msra.mxu0 0
          %665 = vmatpush.bf16.msra.mxu0 0
          %666 = vmatpush.bf16.msra.mxu0 0
          %667 = vmatpush.bf16.msra.mxu0 0
          %668 = vmatpush.bf16.msra.mxu0 0
          %669 = vmatpush.bf16.msra.mxu0 0
          %670 = vmatpush.bf16.msra.mxu0 %v655
          %671 = vmatpush.bf16.msra.mxu0 %v654
          %672 = vmatmul.bf16.gmra.mxu0 %v659
          %v673 = vpop.f32.mrf.mxu0
          %v674 = vadd.f32 0.0, %v673
          %v675 = vpop.f32.mrf.mxu0
          %v676 = vadd.f32 0.0, %v675
          %677 = vmatmul.bf16.gmra.mxu0 %v662
          %v678 = vpop.f32.mrf.mxu0
          %v679 = vadd.f32 0.0, %v678
          %v680 = vpop.f32.mrf.mxu0
          %v681 = vadd.f32 0.0, %v680
          %682 = vdwg.mxu0
          %v683 = vadd.f32 %v623, %v674
          %v684 = vadd.f32 %v625, %v676
          %v685 = vadd.f32 %v628, %v679
          %v686 = vadd.f32 %v630, %v681
          %s687 = scalar_lea.vmem [#allocation8], 48
          %v688 = vld [vmem:[%s687] sm:$0xf]
          %v689 = vld [vmem:[%s687 + $0x4] sm:$0xf]
          %v690 = vld [vmem:[%s687 + $0x8] sm:$0xf]
          %v691 = vld [vmem:[%s687 + $0xc] sm:$0xf]
          %vm692 = vsmask.f32 6400
          %v693 = vrot.slane %v536, 1
          %v694 = vrot.slane %v538, 2
          %v695 = vor.u32 %v693, %v694
          %v696 = vshrl.u32 %v513, 16
          %v698 = vrot.slane %v696, 1
          %v699 = vrot.slane %v543, 2
          %v700 = vor.u32 %v698, %v699
          %v701 = vsel %vm692, %v695, %v700
          %v702 = vrot.slane %v548, 1
          %v703 = vrot.slane %v550, 2
          %v704 = vor.u32 %v702, %v703
          %v705 = vshrl.u32 %v514, 16
          %v707 = vrot.slane %v705, 1
          %v708 = vrot.slane %v555, 2
          %v709 = vor.u32 %v707, %v708
          %v710 = vsel %vm692, %v704, %v709
          %v715 = vunpack.c.l.b16 %v688
          %v716 = vunpack.c.l.b16 %v689
          %v717 = vunpack.c.l.b16 %v690
          %v718 = vunpack.c.l.b16 %v691
          %v719 = vpack.c.b16 %v716, %v715
          %v720 = vpack.c.b16 %v718, %v717
          %v724 = vsel %vm571, %v701, 0
          %v727 = vsel %vm571, %v710, 0
          %729 = vmatpush.bf16.msra.mxu0 0
          %730 = vmatpush.bf16.msra.mxu0 0
          %731 = vmatpush.bf16.msra.mxu0 0
          %732 = vmatpush.bf16.msra.mxu0 0
          %733 = vmatpush.bf16.msra.mxu0 0
          %734 = vmatpush.bf16.msra.mxu0 0
          %735 = vmatpush.bf16.msra.mxu0 %v720
          %736 = vmatpush.bf16.msra.mxu0 %v719
          %737 = vmatmul.bf16.gmra.mxu0 %v724
          %v738 = vpop.f32.mrf.mxu0
          %v739 = vadd.f32 0.0, %v738
          %v740 = vpop.f32.mrf.mxu0
          %v741 = vadd.f32 0.0, %v740
          %742 = vmatmul.bf16.gmra.mxu0 %v727
          %v743 = vpop.f32.mrf.mxu0
          %v744 = vadd.f32 0.0, %v743
          %v745 = vpop.f32.mrf.mxu0
          %v746 = vadd.f32 0.0, %v745
          %747 = vdwg.mxu0
          %v748 = vadd.f32 %v683, %v739
          %v749 = vadd.f32 %v684, %v741
          %v750 = vadd.f32 %v685, %v744
          %v751 = vadd.f32 %v686, %v746
          %s752 = scalar_lea.vmem [#allocation8], 64
          %v753 = vld [vmem:[%s752] sm:$0xf]
          %v754 = vld [vmem:[%s752 + $0x4] sm:$0xf]
          %v755 = vld [vmem:[%s752 + $0x8] sm:$0xf]
          %v756 = vld [vmem:[%s752 + $0xc] sm:$0xf]
          %vm757 = vcmask 1045504
          %v758 = vrot.slane %v523, 2
          %v759 = vrot.slane %v513, 2
          %v760 = vsel %vm757, %v758, %v759
          %v761 = vrot.slane %v524, 2
          %v762 = vrot.slane %v514, 2
          %v763 = vsel %vm757, %v761, %v762
          %v768 = vunpack.c.l.b16 %v753
          %v769 = vunpack.c.l.b16 %v754
          %v770 = vunpack.c.l.b16 %v755
          %v771 = vunpack.c.l.b16 %v756
          %v772 = vpack.c.b16 %v769, %v768
          %v773 = vpack.c.b16 %v771, %v770
          %v777 = vsel %vm571, %v760, 0
          %v780 = vsel %vm571, %v763, 0
          %782 = vmatpush.bf16.msra.mxu0 0
          %783 = vmatpush.bf16.msra.mxu0 0
          %784 = vmatpush.bf16.msra.mxu0 0
          %785 = vmatpush.bf16.msra.mxu0 0
          %786 = vmatpush.bf16.msra.mxu0 0
          %787 = vmatpush.bf16.msra.mxu0 0
          %788 = vmatpush.bf16.msra.mxu0 %v773
          %789 = vmatpush.bf16.msra.mxu0 %v772
          %790 = vmatmul.bf16.gmra.mxu0 %v777
          %v791 = vpop.f32.mrf.mxu0
          %v792 = vadd.f32 0.0, %v791
          %v793 = vpop.f32.mrf.mxu0
          %v794 = vadd.f32 0.0, %v793
          %795 = vmatmul.bf16.gmra.mxu0 %v780
          %v796 = vpop.f32.mrf.mxu0
          %v797 = vadd.f32 0.0, %v796
          %v798 = vpop.f32.mrf.mxu0
          %v799 = vadd.f32 0.0, %v798
          %800 = vdwg.mxu0
          %v801 = vadd.f32 %v748, %v792
          %v802 = vadd.f32 %v749, %v794
          %v803 = vadd.f32 %v750, %v797
          %v804 = vadd.f32 %v751, %v799
          %s805 = scalar_lea.vmem [#allocation8], 80
          %v806 = vld [vmem:[%s805] sm:$0xf]
          %v807 = vld [vmem:[%s805 + $0x4] sm:$0xf]
          %v808 = vld [vmem:[%s805 + $0x8] sm:$0xf]
          %v809 = vld [vmem:[%s805 + $0xc] sm:$0xf]
          %vm810 = vsmask.f32 5376
          %v811 = vrot.slane %v536, 2
          %v812 = vrot.slane %v538, 3
          %v813 = vor.u32 %v811, %v812
          %v814 = vrot.slane %v696, 2
          %v815 = vrot.slane %v543, 3
          %v816 = vor.u32 %v814, %v815
          %v817 = vsel %vm810, %v813, %v816
          %v818 = vrot.slane %v548, 2
          %v819 = vrot.slane %v550, 3
          %v820 = vor.u32 %v818, %v819
          %v821 = vrot.slane %v705, 2
          %v822 = vrot.slane %v555, 3
          %v823 = vor.u32 %v821, %v822
          %v824 = vsel %vm810, %v820, %v823
          %v829 = vunpack.c.l.b16 %v806
          %v830 = vunpack.c.l.b16 %v807
          %v831 = vunpack.c.l.b16 %v808
          %v832 = vunpack.c.l.b16 %v809
          %v833 = vpack.c.b16 %v830, %v829
          %v834 = vpack.c.b16 %v832, %v831
          %v838 = vsel %vm571, %v817, 0
          %v841 = vsel %vm571, %v824, 0
          %843 = vmatpush.bf16.msra.mxu0 0
          %844 = vmatpush.bf16.msra.mxu0 0
          %845 = vmatpush.bf16.msra.mxu0 0
          %846 = vmatpush.bf16.msra.mxu0 0
          %847 = vmatpush.bf16.msra.mxu0 0
          %848 = vmatpush.bf16.msra.mxu0 0
          %849 = vmatpush.bf16.msra.mxu0 %v834
          %850 = vmatpush.bf16.msra.mxu0 %v833
          %851 = vmatmul.bf16.gmra.mxu0 %v838
          %v852 = vpop.f32.mrf.mxu0
          %v853 = vadd.f32 0.0, %v852
          %v854 = vpop.f32.mrf.mxu0
          %v855 = vadd.f32 0.0, %v854
          %856 = vmatmul.bf16.gmra.mxu0 %v841
          %v857 = vpop.f32.mrf.mxu0
          %v858 = vadd.f32 0.0, %v857
          %v859 = vpop.f32.mrf.mxu0
          %v860 = vadd.f32 0.0, %v859
          %861 = vdwg.mxu0
          %v862 = vadd.f32 %v801, %v853
          %v863 = vadd.f32 %v802, %v855
          %v864 = vadd.f32 %v803, %v858
          %v865 = vadd.f32 %v804, %v860
          %s866 = scalar_lea.vmem [#allocation8], 96
          %v867 = vld [vmem:[%s866] sm:$0xf]
          %v868 = vld [vmem:[%s866 + $0x4] sm:$0xf]
          %v869 = vld [vmem:[%s866 + $0x8] sm:$0xf]
          %v870 = vld [vmem:[%s866 + $0xc] sm:$0xf]
          %vm871 = vcmask 1044480
          %v872 = vrot.slane %v523, 3
          %v873 = vrot.slane %v513, 3
          %v874 = vsel %vm871, %v872, %v873
          %v875 = vrot.slane %v524, 3
          %v876 = vrot.slane %v514, 3
          %v877 = vsel %vm871, %v875, %v876
          %v882 = vunpack.c.l.b16 %v867
          %v883 = vunpack.c.l.b16 %v868
          %v884 = vunpack.c.l.b16 %v869
          %v885 = vunpack.c.l.b16 %v870
          %v886 = vpack.c.b16 %v883, %v882
          %v887 = vpack.c.b16 %v885, %v884
          %v891 = vsel %vm571, %v874, 0
          %v894 = vsel %vm571, %v877, 0
          %896 = vmatpush.bf16.msra.mxu0 0
          %897 = vmatpush.bf16.msra.mxu0 0
          %898 = vmatpush.bf16.msra.mxu0 0
          %899 = vmatpush.bf16.msra.mxu0 0
          %900 = vmatpush.bf16.msra.mxu0 0
          %901 = vmatpush.bf16.msra.mxu0 0
          %902 = vmatpush.bf16.msra.mxu0 %v887
          %903 = vmatpush.bf16.msra.mxu0 %v886
          %904 = vmatmul.bf16.gmra.mxu0 %v891
          %v905 = vpop.f32.mrf.mxu0
          %v906 = vadd.f32 0.0, %v905
          %v907 = vpop.f32.mrf.mxu0
          %v908 = vadd.f32 0.0, %v907
          %909 = vmatmul.bf16.gmra.mxu0 %v894
          %v910 = vpop.f32.mrf.mxu0
          %v911 = vadd.f32 0.0, %v910
          %v912 = vpop.f32.mrf.mxu0
          %v913 = vadd.f32 0.0, %v912
          %914 = vdwg.mxu0
          %v915 = vadd.f32 %v862, %v906
          %v916 = vadd.f32 %v863, %v908
          %v917 = vadd.f32 %v864, %v911
          %v918 = vadd.f32 %v865, %v913
          %v919 = vld [vmem:[%s4] sm:$0x1]
          %v921 = vperm.slane %v919, 0
          %v923 = vadd.f32 %v915, %v921
          %v924 = vadd.f32 %v916, %v921
          %v925 = vadd.f32 %v917, %v921
          %v926 = vadd.f32 %v918, %v921
          %v927 = vmax.f32 %v923, 0.0
          %v928 = vmax.f32 %v924, 0.0
          %v929 = vmax.f32 %v925, 0.0
          %v930 = vmax.f32 %v926, 0.0
          %s931 = sadd.s32 %s35, 1
          %s932 = smul.u32 %s931, 16
          %p933 = scmp.gt.s32.totalorder %s932, 10
          %p934 = scmp.le.s32.totalorder %s932, 10
          // Predicated region
          $region85: #{tpu_custom_call.1} parent=83 // pred_check
            %p935 = pneg %p934
          $region86: #{tpu_custom_call.1} parent=83 // pred_check_branch
            %937 = sbr.rel (%p935) target = $region88
          $region87: #{tpu_custom_call.1} parent=83 // pred_region
            %v938 = vld [vmem:[#allocation2] sm:$0x3]
            %v939 = vsel %vm571, %v927, 0.0
            %v940 = vsel %vm571, %v928, 0.0
            %v941 = vadd.f32 %v939, %v940
            %v942 = vrot.slane %v941, 4
            %v943 = vadd.f32 %v941, %v942
            %v944 = vrot.slane %v943, 2
            %v945 = vadd.f32 %v943, %v944
            %v946 = vrot.slane %v945, 1
            %v947 = vadd.f32 %v945, %v946
            %v948 = vsel %vm571, %v929, 0.0
            %v949 = vsel %vm571, %v930, 0.0
            %v950 = vadd.f32 %v948, %v949
            %v951 = vrot.slane %v950, 4
            %v952 = vadd.f32 %v950, %v951
            %v953 = vrot.slane %v952, 2
            %v954 = vadd.f32 %v952, %v953
            %v955 = vrot.slane %v954, 1
            %v956 = vadd.f32 %v954, %v955
            %vm959 = vcmask 1041409
            %v960 = vsel %vm959, %v956, %v947
            %v962 = vadd.f32 %v938, %v960
            %vm963 = vcmask 254976
            %964 = vst.msk [vmem:[#allocation2] sm:$0x3] %vm963, %v962
          $region88: #{tpu_custom_call.1} parent=83 // pred_fallthru
            _
          // Predicated region
          $region89: #{tpu_custom_call.1} parent=83 // pred_check
            %p965 = pneg %p933
          $region90: #{tpu_custom_call.1} parent=83 // pred_check_branch
            %967 = sbr.rel (%p965) target = $region92
          $region91: #{tpu_custom_call.1} parent=83 // pred_region
            %v968 = vlaneseq
            %v969 = vshrl.u32 %v968, 7
            %v970 = vadd.s32 %v969, 8
            %v971 = vstv %s504
            %v972 = vadd.s32 %v971, %v969
            %v973 = vadd.s32 %v971, %v970
            %v974 = vld [vmem:[#allocation2] sm:$0x3]
            %vm975 = vcmp.lt.s32.totalorder %v972, 10
            %vm976 = vcmp.lt.s32.totalorder %v973, 10
            %v977 = vsel %vm975, 1, 0
            %v978 = vsel %vm976, 1, 0
            %vm979 = vcmp.eq.s32.totalorder %v977, 1
            %vm980 = vcmp.eq.s32.totalorder %v978, 1
            %v981 = vsel %vm979, %v927, 0.0
            %v982 = vsel %vm980, %v928, 0.0
            %v983 = vsel %vm979, %v929, 0.0
            %v984 = vsel %vm980, %v930, 0.0
            %v985 = vsel %vm571, %v981, 0.0
            %v986 = vsel %vm571, %v982, 0.0
            %v987 = vadd.f32 %v985, %v986
            %v988 = vrot.slane %v987, 4
            %v989 = vadd.f32 %v987, %v988
            %v990 = vrot.slane %v989, 2
            %v991 = vadd.f32 %v989, %v990
            %v992 = vrot.slane %v991, 1
            %v993 = vadd.f32 %v991, %v992
            %v994 = vsel %vm571, %v983, 0.0
            %v995 = vsel %vm571, %v984, 0.0
            %v996 = vadd.f32 %v994, %v995
            %v997 = vrot.slane %v996, 4
            %v998 = vadd.f32 %v996, %v997
            %v999 = vrot.slane %v998, 2
            %v1000 = vadd.f32 %v998, %v999
            %v1001 = vrot.slane %v1000, 1
            %v1002 = vadd.f32 %v1000, %v1001
            %vm1005 = vcmask 1041409
            %v1006 = vsel %vm1005, %v1002, %v993
            %v1008 = vadd.f32 %v974, %v1006
            %vm1009 = vcmask 254976
            %1010 = vst.msk [vmem:[#allocation2] sm:$0x3] %vm1009, %v1008
          $region92: #{tpu_custom_call.1} parent=83 // pred_fallthru
            _
        $region84: #{tpu_custom_call.1} parent=55 // pred_fallthru
          _
        // Predicated region
        $region93: #{tpu_custom_call.1} parent=55 // pred_check
          %p1011 = pneg %p498
        $region94: #{tpu_custom_call.1} parent=55 // pred_check_branch
          %1013 = sbr.rel (%p1011) target = $region96
        $region95: #{tpu_custom_call.1} parent=55 // pred_region
          %v1014 = vld [vmem:[#allocation2] sm:$0x3]
          %v1015 = vld [vmem:[%s496] sm:$0x3]
          %1017 = vset.pattern.permute.xlu0 0
          %1018 = vperm.xlu0 %1017, %v1015
          %v1019 = vpop.permute.xlu0 %1018
          %v1021 = vmul.f32 %v1014, %v1019
          %v1022 = vld [vmem:[#allocation9] sm:$0xff]
          %v1023 = vld [vmem:[#allocation9 + $0x8] sm:$0xff]
          %v1024 = vld [vmem:[#allocation9 + $0x10] sm:$0xff]
          %v1025 = vld [vmem:[#allocation9 + $0x18] sm:$0xff]
          %v1026 = vld [vmem:[%s6] sm:$0x1]
          %v1028 = vperm.slane %v1026, 0
          %vm1030 = vcmask 261120
          %v1032 = vsel %vm1030, %v1021, 0
          %1034 = vmatpush.msra.mxu0 0.0
          %1035 = vmatpush.msra.mxu0 0.0
          %1036 = vmatpush.msra.mxu0 0.0
          %1037 = vmatpush.msra.mxu0 0.0
          %1038 = vmatpush.msra.mxu0 0.0
          %1039 = vmatpush.msra.mxu0 0.0
          %1040 = vmatpush.msra.mxu0 0.0
          %1041 = vmatpush.msra.mxu0 0.0
          %1042 = vmatpush.msra.mxu0 0.0
          %1043 = vmatpush.msra.mxu0 0.0
          %1044 = vmatpush.msra.mxu0 0.0
          %1045 = vmatpush.msra.mxu0 0.0
          %1046 = vmatpush.msra.mxu0 %v1025
          %1047 = vmatpush.msra.mxu0 %v1024
          %1048 = vmatpush.msra.mxu0 %v1023
          %1049 = vmatpush.msra.mxu0 %v1022
          %1050 = vmatmul.f32.gmra.mxu0 %v1032
          %v1051 = vpop.f32.mrf.mxu0
          %v1052 = vadd.f32 %v1028, %v1051
          %1053 = vdwg.mxu0
          %v1054 = vmax.f32 %v1052, 0.0
          %v1055 = vld [vmem:[#allocation11] sm:$0xff]
          %v1056 = vld [vmem:[#allocation11 + $0x8] sm:$0xff]
          %v1057 = vld [vmem:[#allocation11 + $0x10] sm:$0xff]
          %v1058 = vld [vmem:[#allocation11 + $0x18] sm:$0xff]
          %v1059 = vld [vmem:[#allocation11 + $0x20] sm:$0xff]
          %v1060 = vld [vmem:[#allocation11 + $0x28] sm:$0xff]
          %v1061 = vld [vmem:[#allocation11 + $0x30] sm:$0xff]
          %v1062 = vld [vmem:[#allocation11 + $0x38] sm:$0xff]
          %v1063 = vld [vmem:[#allocation11 + $0x40] sm:$0xff]
          %v1064 = vld [vmem:[#allocation11 + $0x48] sm:$0xff]
          %v1065 = vld [vmem:[#allocation11 + $0x50] sm:$0xff]
          %v1066 = vld [vmem:[#allocation11 + $0x58] sm:$0xff]
          %v1067 = vld [vmem:[#allocation11 + $0x60] sm:$0xff]
          %v1068 = vld [vmem:[#allocation11 + $0x68] sm:$0xff]
          %v1069 = vld [vmem:[#allocation11 + $0x70] sm:$0xff]
          %v1070 = vld [vmem:[#allocation11 + $0x78] sm:$0xff]
          %v1071 = vld [vmem:[%s8] sm:$0x1]
          %v1073 = vperm.slane %v1071, 0
          %1075 = vmatpush.msra.mxu0 %v1070
          %1076 = vmatpush.msra.mxu0 %v1069
          %1077 = vmatpush.msra.mxu0 %v1068
          %1078 = vmatpush.msra.mxu0 %v1067
          %1079 = vmatpush.msra.mxu0 %v1066
          %1080 = vmatpush.msra.mxu0 %v1065
          %1081 = vmatpush.msra.mxu0 %v1064
          %1082 = vmatpush.msra.mxu0 %v1063
          %1083 = vmatpush.msra.mxu0 %v1062
          %1084 = vmatpush.msra.mxu0 %v1061
          %1085 = vmatpush.msra.mxu0 %v1060
          %1086 = vmatpush.msra.mxu0 %v1059
          %1087 = vmatpush.msra.mxu0 %v1058
          %1088 = vmatpush.msra.mxu0 %v1057
          %1089 = vmatpush.msra.mxu0 %v1056
          %1090 = vmatpush.msra.mxu0 %v1055
          %1091 = vmatmul.f32.gmra.mxu0 %v1054
          %v1092 = vpop.f32.mrf.mxu0
          %v1093 = vadd.f32 %v1073, %v1092
          %1094 = vdwg.mxu0
          %1095 = vst [vmem:[%s487] sm:$0x3] %v1093
        $region96: #{tpu_custom_call.1} parent=55 // pred_fallthru
          _
        %s1096 = sand.u32 %s266, 1
        %s1097 = scalar_lea.sflag [#allocation5], %s1096
        %s1098 = sand.u32 %s266, 1
        %s1099 = smul.addr %s1098, 2
        %s1100 = scalar_lea.vmem [#allocation12], %s1099
        // Predicated region
        $region97: #{tpu_custom_call.1} parent=55 // pred_check
          %p1101 = pneg %p276
        $region98: #{tpu_custom_call.1} parent=55 // pred_check_branch
          %1103 = sbr.rel (%p1101) target = $region100
        $region99: #{tpu_custom_call.1} parent=55 // pred_region
          %1105 = vsyncadd %s1097, 0
          %s1106 = smul.addr %s34, 2
          %s1107 = scalar_lea.hbm %s9, %s1106
          %s1109 = sshll.u32 %s1100, 4
          %s1110 = int_to_ptr.vmem [resolvable:$true] %s1109
          %s1111 = sshll.u32 %s1107, 4
          %s1112 = int_to_ptr.hbm [resolvable:$true] %s1111
          %1114 = dma.vmem_to_hbm [thread:$0]  %s1110, 32, %s1112, %s1097
        $region100: #{tpu_custom_call.1} parent=55 // pred_fallthru
          _
      $region56: #{tpu_custom_call.1} parent=5 // pred_fallthru
        _
      %p1115 = scmp.le.s32.totalorder 2, %s25
      // Predicated region
      $region101: #{tpu_custom_call.1} parent=5 // pred_check
        %p1116 = pneg %p1115
      $region102: #{tpu_custom_call.1} parent=5 // pred_check_branch
        %1118 = sbr.rel (%p1116) target = $region104
      $region103: #{tpu_custom_call.1} parent=5 // pred_region
        %s1119 = ssub.s32 %s25, 2
        // Predicated region
        $region105: #{tpu_custom_call.1} parent=103 // pred_check
          %p1120 = pneg %p282
        $region106: #{tpu_custom_call.1} parent=103 // pred_check_branch
          %1122 = sbr.rel (%p1120) target = $region108
        $region107: #{tpu_custom_call.1} parent=103 // pred_region
          %s1123 = sand.u32 %s267, 1
          %s1124 = scalar_lea.sflag [#allocation5], %s1123
          %s1125 = sand.u32 %s267, 1
          %s1126 = smul.addr %s1125, 2
          %s1127 = scalar_lea.vmem [#allocation12], %s1126
          %1129 = dma.done %s1124, 32
        $region108: #{tpu_custom_call.1} parent=103 // pred_fallthru
          _
      $region104: #{tpu_custom_call.1} parent=5 // pred_fallthru
        _
    $region6: #{tpu_custom_call.1} parent=1 // loop_footer
      %s29 = sadd.s32 1, %s25
    $region7: #{tpu_custom_call.1} parent=1 // loop_footer_branch
      %24 = sbr.rel target = $region3
    $region8: #{tpu_custom_call.1} parent=1 // loop_exit
      _
    %1130 = vsyncpa [#allocation4], 1
    %s1131 = scalar_lea.sflag [#allocation4], 1
    %1132 = vsyncpa %s1131, 1
    %1133 = vsyncpa [#allocation7], 1
    %s1134 = scalar_lea.sflag [#allocation7], 1
    %1135 = vsyncpa %s1134, 1
    %1136 = vsyncpa [#allocation10], 1
    %1137 = vsyncpa [#allocation5], 1
    %s1138 = scalar_lea.sflag [#allocation5], 1
    %1139 = vsyncpa %s1138, 1

// kernel: tpu_custom_call.1
$region0: #{tpu_custom_call.1}
  #allocation0 [shape = 'u32[]', space=smem, size = 0x4, offset = 0x4, fixed_abs, tag = 'smem constant byte address 0x4 - core index']
  #allocation1 [shape = 'u32[72,128]{1,0:T(1,128)}', space=vmem, size = 0x9000, scoped, tag = 'internal scratch']
  #allocation2 [shape = 'f32[2,32]{1,0:T(2,128)}', space=vmem, size = 0x400, scoped, tag = 'scratch operand']
  %s0 = inlined_call_operand.hbm [shape: bf16[2,2,16,32], index: 0, kind: input, shape index: {}]
  %s1 = inlined_call_operand.hbm [shape: bf16[2,2,16,32], index: 1, kind: input, shape index: {}]
  %s2 = inlined_call_operand.vmem [shape: f32[2,2,1], index: 2, kind: input, shape index: {}]
  %s3 = inlined_call_operand.hbm [shape: bf16[7,32,32], index: 3, kind: input, shape index: {}]
  %s4 = inlined_call_operand.vmem [shape: f32[1,32], index: 4, kind: input, shape index: {}]
  %s5 = inlined_call_operand.hbm [shape: f32[32,128], index: 5, kind: input, shape index: {}]
  %s6 = inlined_call_operand.vmem [shape: f32[1,128], index: 6, kind: input, shape index: {}]
  %s7 = inlined_call_operand.hbm [shape: f32[128,128], index: 7, kind: input, shape index: {}]
  %s8 = inlined_call_operand.vmem [shape: f32[1,128], index: 8, kind: input, shape index: {}]
  %s9 = inlined_call_operand.hbm [shape: f32[2,2,128], index: 9, kind: output, shape index: {}]
  %s10 = sld [smem:[#allocation0]]
  $region109: #{tpu_custom_call.1} parent=0
    _
  %s12 = ssub.s32 1, %s10
  %s13 = scalar_select 0, %s12, %s10
  $region1: #{tpu_custom_call.1} parent=0
    #allocation3 [shape = 'u8[16384]{0}', space=vmem, size = 0x4000, scoped, tag = 'input window, operand 0']
    #allocation4 [shape = 's32[2]{0}', space=sflag, size = 0x8, scoped, tag = 'scoped memory for tpu_custom_call.1']
    #allocation5 [shape = 's32[2]{0}', space=sflag, size = 0x8, scoped, tag = 'scoped memory for tpu_custom_call.1']
    #allocation6 [shape = 'u8[8192]{0}', space=vmem, size = 0x2000, scoped, tag = 'input window, operand 1']
    #allocation7 [shape = 's32[2]{0}', space=sflag, size = 0x8, scoped, tag = 'scoped memory for tpu_custom_call.1']
    #allocation8 [shape = 'u8[57344]{0}', space=vmem, size = 0xe000, scoped, tag = 'input window, operand 3, single buffered']
    #allocation9 [shape = 'u8[16384]{0}', space=vmem, size = 0x4000, scoped, tag = 'input window, operand 5, single buffered']
    #allocation10 [shape = 's32[1]{0}', space=sflag, size = 0x4, scoped, tag = 'scoped memory for tpu_custom_call.1']
    #allocation11 [shape = 'u8[65536]{0}', space=vmem, size = 0x10000, scoped, tag = 'input window, operand 7, single buffered']
    #allocation12 [shape = 'u8[2048]{0}', space=vmem, size = 0x800, scoped, tag = 'output window, operand 0']
    %14 = vsyncpa [#allocation4], 0
    %s15 = scalar_lea.sflag [#allocation4], 1
    %16 = vsyncpa %s15, 0
    %17 = vsyncpa [#allocation7], 0
    %s18 = scalar_lea.sflag [#allocation7], 1
    %19 = vsyncpa %s18, 0
    %20 = vsyncpa [#allocation10], 0
    %21 = vsyncpa [#allocation5], 0
    %s22 = scalar_lea.sflag [#allocation5], 1
    %23 = vsyncpa %s22, 0
    loop: start=0, step=1, limit=4
    $region2: #{tpu_custom_call.1} parent=1 // loop_pre_header
      _
    $region3: #{tpu_custom_call.1} parent=1 // loop_header
      %s25 = sphi 0, %s29
      %p26 = scmp.ge.s32.totalorder %s25, 4
      %s32 = sphi 0, %s44
      %s33 = sphi 0, %s40
      %s34 = sphi 0, %s32
      %s35 = sphi 0, %s33
      %s36 = sphi 0, %s34
      %s37 = sphi 0, %s35
      %s49 = sphi 0, %s51
      %s52 = sphi 0, %s49
      %s53 = sphi 0, %s52
      %s69 = sphi 0, %s53
      %s85 = sphi 0, %s87
      %s88 = sphi 0, %s85
      %s89 = sphi 0, %s88
      %s105 = sphi 0, %s89
      %s111 = sphi 0, %s113
      %s114 = sphi 0, %s111
      %s115 = sphi 0, %s114
      %s131 = sphi 0, %s115
      %s135 = sphi 0, %s135
      %s137 = sphi 0, %s135
      %s138 = sphi 0, %s137
      %s152 = sphi 0, %s138
      %s156 = sphi 0, %s156
      %s158 = sphi 0, %s156
      %s159 = sphi 0, %s158
      %s173 = sphi 0, %s159
      %s177 = sphi 0, %s177
      %s179 = sphi 0, %s177
      %s180 = sphi 0, %s179
      %s194 = sphi 0, %s180
      %s198 = sphi 0, %s198
      %s200 = sphi 0, %s198
      %s201 = sphi 0, %s200
      %s215 = sphi 0, %s201
      %s219 = sphi 0, %s219
      %s221 = sphi 0, %s219
      %s222 = sphi 0, %s221
      %s236 = sphi 0, %s222
      %s240 = sphi 0, %s240
      %s242 = sphi 0, %s240
      %s243 = sphi 0, %s242
      %s257 = sphi 0, %s243
      %s263 = sphi 0, %s265
      %s266 = sphi 0, %s263
      %s267 = sphi 0, %s266
      %s283 = sphi 0, %s267
    $region4: #{tpu_custom_call.1} parent=1 // loop_header_branch
      %28 = sbr.rel (%p26) target = $region8
    $region5: #{tpu_custom_call.1} parent=1 // loop_body
      %s30 = ssub.s32 %s25, 1
      %s31 = ssub.s32 %s25, 2
      %s38 = sadd.s32 1, %s33
      %p39 = scmp.ge.s32.totalorder %s38, 1
      %s40 = scalar_select %p39, 0, %s38
      %s41 = sadd.s32 1, %s32
      %s42 = scalar_select %p39, %s41, %s32
      %p43 = scmp.ge.s32.totalorder %s42, 2
      %s44 = scalar_select %p43, 0, %s42
      %s45 = ssub.s32 %s32, %s44
      %s46 = ssub.s32 %s33, %s40
      %s47 = sor.u32 %s45, %s46
      %p48 = scmp.eq.s32.totalorder %s47, 0
      %s50 = sadd.s32 %s49, 1
      %s51 = scalar_select %p48, %s49, %s50
      %p54 = pneg %p48
      %p55 = scmp.eq.s32.totalorder %s25, 1
      %p56 = por %p54, %p55
      %p57 = scmp.ne.s32.totalorder %s49, %s52
      %p58 = scmp.eq.s32.totalorder %s25, 0
      %p59 = por %p57, %p58
      %p60 = scmp.ne.s32.totalorder %s49, %s52
      %p61 = scmp.eq.s32.totalorder %s30, 1
      %p62 = por %p60, %p61
      %p63 = scmp.ne.s32.totalorder %s52, %s53
      %p64 = scmp.eq.s32.totalorder %s30, 0
      %p65 = por %p63, %p64
      %p66 = scmp.ne.s32.totalorder %s52, %s53
      %p67 = scmp.eq.s32.totalorder %s31, 1
      %p68 = por %p66, %p67
      %p70 = scmp.ne.s32.totalorder %s53, %s69
      %p71 = scmp.eq.s32.totalorder %s31, 0
      %p72 = por %p70, %p71
      %s73 = sadd.s32 %s33, 1
      %s74 = smul.u32 %s73, 2
      %p75 = scmp.lt.s32.totalorder %s74, 1
      %s76 = scalar_select %p75, %s74, 1
      %s77 = sadd.s32 %s40, 1
      %s78 = smul.u32 %s77, 2
      %p79 = scmp.lt.s32.totalorder %s78, 1
      %s80 = scalar_select %p79, %s78, 1
      %s81 = ssub.s32 %s32, %s44
      %s82 = ssub.s32 %s76, %s80
      %s83 = sor.u32 %s81, %s82
      %p84 = scmp.eq.s32.totalorder %s83, 0
      %s86 = sadd.s32 %s85, 1
      %s87 = scalar_select %p84, %s85, %s86
      %p90 = pneg %p84
      %p91 = scmp.eq.s32.totalorder %s25, 1
      %p92 = por %p90, %p91
      %p93 = scmp.ne.s32.totalorder %s85, %s88
      %p94 = scmp.eq.s32.totalorder %s25, 0
      %p95 = por %p93, %p94
      %p96 = scmp.ne.s32.totalorder %s85, %s88
      %p97 = scmp.eq.s32.totalorder %s30, 1
      %p98 = por %p96, %p97
      %p99 = scmp.ne.s32.totalorder %s88, %s89
      %p100 = scmp.eq.s32.totalorder %s30, 0
      %p101 = por %p99, %p100
      %p102 = scmp.ne.s32.totalorder %s88, %s89
      %p103 = scmp.eq.s32.totalorder %s31, 1
      %p104 = por %p102, %p103
      %p106 = scmp.ne.s32.totalorder %s89, %s105
      %p107 = scmp.eq.s32.totalorder %s31, 0
      %p108 = por %p106, %p107
      %s109 = ssub.s32 %s32, %s44
      %p110 = scmp.eq.s32.totalorder %s109, 0
      %s112 = sadd.s32 %s111, 1
      %s113 = scalar_select %p110, %s111, %s112
      %p116 = pneg %p110
      %p117 = scmp.eq.s32.totalorder %s25, 1
      %p118 = por %p116, %p117
      %p119 = scmp.ne.s32.totalorder %s111, %s114
      %p120 = scmp.eq.s32.totalorder %s25, 0
      %p121 = por %p119, %p120
      %p122 = scmp.ne.s32.totalorder %s111, %s114
      %p123 = scmp.eq.s32.totalorder %s30, 1
      %p124 = por %p122, %p123
      %p125 = scmp.ne.s32.totalorder %s114, %s115
      %p126 = scmp.eq.s32.totalorder %s30, 0
      %p127 = por %p125, %p126
      %p128 = scmp.ne.s32.totalorder %s114, %s115
      %p129 = scmp.eq.s32.totalorder %s31, 1
      %p130 = por %p128, %p129
      %p132 = scmp.ne.s32.totalorder %s115, %s131
      %p133 = scmp.eq.s32.totalorder %s31, 0
      %p134 = por %p132, %p133
      %s136 = sadd.s32 %s135, 1
      %p139 = scmp.eq.s32.totalorder %s25, 1
      %p140 = scmp.ne.s32.totalorder %s135, %s137
      %p141 = scmp.eq.s32.totalorder %s25, 0
      %p142 = por %p140, %p141
      %p143 = scmp.ne.s32.totalorder %s135, %s137
      %p144 = scmp.eq.s32.totalorder %s30, 1
      %p145 = por %p143, %p144
      %p146 = scmp.ne.s32.totalorder %s137, %s138
      %p147 = scmp.eq.s32.totalorder %s30, 0
      %p148 = por %p146, %p147
      %p149 = scmp.ne.s32.totalorder %s137, %s138
      %p150 = scmp.eq.s32.totalorder %s31, 1
      %p151 = por %p149, %p150
      %p153 = scmp.ne.s32.totalorder %s138, %s152
      %p154 = scmp.eq.s32.totalorder %s31, 0
      %p155 = por %p153, %p154
      %s157 = sadd.s32 %s156, 1
      %p160 = scmp.eq.s32.totalorder %s25, 1
      %p161 = scmp.ne.s32.totalorder %s156, %s158
      %p162 = scmp.eq.s32.totalorder %s25, 0
      %p163 = por %p161, %p162
      %p164 = scmp.ne.s32.totalorder %s156, %s158
      %p165 = scmp.eq.s32.totalorder %s30, 1
      %p166 = por %p164, %p165
      %p167 = scmp.ne.s32.totalorder %s158, %s159
      %p168 = scmp.eq.s32.totalorder %s30, 0
      %p169 = por %p167, %p168
      %p170 = scmp.ne.s32.totalorder %s158, %s159
      %p171 = scmp.eq.s32.totalorder %s31, 1
      %p172 = por %p170, %p171
      %p174 = scmp.ne.s32.totalorder %s159, %s173
      %p175 = scmp.eq.s32.totalorder %s31, 0
      %p176 = por %p174, %p175
      %s178 = sadd.s32 %s177, 1
      %p181 = scmp.eq.s32.totalorder %s25, 1
      %p182 = scmp.ne.s32.totalorder %s177, %s179
      %p183 = scmp.eq.s32.totalorder %s25, 0
      %p184 = por %p182, %p183
      %p185 = scmp.ne.s32.totalorder %s177, %s179
      %p186 = scmp.eq.s32.totalorder %s30, 1
      %p187 = por %p185, %p186
      %p188 = scmp.ne.s32.totalorder %s179, %s180
      %p189 = scmp.eq.s32.totalorder %s30, 0
      %p190 = por %p188, %p189
      %p191 = scmp.ne.s32.totalorder %s179, %s180
      %p192 = scmp.eq.s32.totalorder %s31, 1
      %p193 = por %p191, %p192
      %p195 = scmp.ne.s32.totalorder %s180, %s194
      %p196 = scmp.eq.s32.totalorder %s31, 0
      %p197 = por %p195, %p196
      %s199 = sadd.s32 %s198, 1
      %p202 = scmp.eq.s32.totalorder %s25, 1
      %p203 = scmp.ne.s32.totalorder %s198, %s200
      %p204 = scmp.eq.s32.totalorder %s25, 0
      %p205 = por %p203, %p204
      %p206 = scmp.ne.s32.totalorder %s198, %s200
      %p207 = scmp.eq.s32.totalorder %s30, 1
      %p208 = por %p206, %p207
      %p209 = scmp.ne.s32.totalorder %s200, %s201
      %p210 = scmp.eq.s32.totalorder %s30, 0
      %p211 = por %p209, %p210
      %p212 = scmp.ne.s32.totalorder %s200, %s201
      %p213 = scmp.eq.s32.totalorder %s31, 1
      %p214 = por %p212, %p213
      %p216 = scmp.ne.s32.totalorder %s201, %s215
      %p217 = scmp.eq.s32.totalorder %s31, 0
      %p218 = por %p216, %p217
      %s220 = sadd.s32 %s219, 1
      %p223 = scmp.eq.s32.totalorder %s25, 1
      %p224 = scmp.ne.s32.totalorder %s219, %s221
      %p225 = scmp.eq.s32.totalorder %s25, 0
      %p226 = por %p224, %p225
      %p227 = scmp.ne.s32.totalorder %s219, %s221
      %p228 = scmp.eq.s32.totalorder %s30, 1
      %p229 = por %p227, %p228
      %p230 = scmp.ne.s32.totalorder %s221, %s222
      %p231 = scmp.eq.s32.totalorder %s30, 0
      %p232 = por %p230, %p231
      %p233 = scmp.ne.s32.totalorder %s221, %s222
      %p234 = scmp.eq.s32.totalorder %s31, 1
      %p235 = por %p233, %p234
      %p237 = scmp.ne.s32.totalorder %s222, %s236
      %p238 = scmp.eq.s32.totalorder %s31, 0
      %p239 = por %p237, %p238
      %s241 = sadd.s32 %s240, 1
      %p244 = scmp.eq.s32.totalorder %s25, 1
      %p245 = scmp.ne.s32.totalorder %s240, %s242
      %p246 = scmp.eq.s32.totalorder %s25, 0
      %p247 = por %p245, %p246
      %p248 = scmp.ne.s32.totalorder %s240, %s242
      %p249 = scmp.eq.s32.totalorder %s30, 1
      %p250 = por %p248, %p249
      %p251 = scmp.ne.s32.totalorder %s242, %s243
      %p252 = scmp.eq.s32.totalorder %s30, 0
      %p253 = por %p251, %p252
      %p254 = scmp.ne.s32.totalorder %s242, %s243
      %p255 = scmp.eq.s32.totalorder %s31, 1
      %p256 = por %p254, %p255
      %p258 = scmp.ne.s32.totalorder %s243, %s257
      %p259 = scmp.eq.s32.totalorder %s31, 0
      %p260 = por %p258, %p259
      %s261 = ssub.s32 %s32, %s44
      %p262 = scmp.eq.s32.totalorder %s261, 0
      %s264 = sadd.s32 %s263, 1
      %s265 = scalar_select %p262, %s263, %s264
      %p268 = pneg %p262
      %p269 = scmp.eq.s32.totalorder %s25, 1
      %p270 = por %p268, %p269
      %p271 = scmp.ne.s32.totalorder %s263, %s266
      %p272 = scmp.eq.s32.totalorder %s25, 0
      %p273 = por %p271, %p272
      %p274 = scmp.ne.s32.totalorder %s263, %s266
      %p275 = scmp.eq.s32.totalorder %s30, 1
      %p276 = por %p274, %p275
      %p277 = scmp.ne.s32.totalorder %s266, %s267
      %p278 = scmp.eq.s32.totalorder %s30, 0
      %p279 = por %p277, %p278
      %p280 = scmp.ne.s32.totalorder %s266, %s267
      %p281 = scmp.eq.s32.totalorder %s31, 1
      %p282 = por %p280, %p281
      %p284 = scmp.ne.s32.totalorder %s267, %s283
      %p285 = scmp.eq.s32.totalorder %s31, 0
      %p286 = por %p284, %p285
      %p287 = scmp.le.s32.totalorder 1, %s25
      %p288 = scmp.lt.s32.totalorder %s25, 3
      %p289 = pnand %p287, %p288
      %p290 = pneg %p289
      // Predicated region
      $region9: #{tpu_custom_call.1} parent=5 // pred_check
        _
      $region10: #{tpu_custom_call.1} parent=5 // pred_check_branch
        %292 = sbr.rel (%p289) target = $region12
      $region11: #{tpu_custom_call.1} parent=5 // pred_region
        %s293 = ssub.s32 %s25, 1
        // Predicated region
        $region13: #{tpu_custom_call.1} parent=11 // pred_check
          %p294 = pneg %p148
        $region14: #{tpu_custom_call.1} parent=11 // pred_check_branch
          %296 = sbr.rel (%p294) target = $region16
        $region15: #{tpu_custom_call.1} parent=11 // pred_region
          %298 = vsyncadd [#allocation7], 0
          %s299 = sshll.u32 %s3, 4
          %s300 = int_to_ptr.hbm [resolvable:$true] %s299
          %s301 = sshll.u32 [#allocation8], 4
          %s302 = int_to_ptr.vmem [resolvable:$true] %s301
          %307 = dma.hbm_to_vmem [thread:$0]  %s300, 1792, %s302, [#allocation7], 64, 64, 4
        $region16: #{tpu_custom_call.1} parent=11 // pred_fallthru
          _
        // Predicated region
        $region17: #{tpu_custom_call.1} parent=11 // pred_check
          %p308 = pneg %p169
        $region18: #{tpu_custom_call.1} parent=11 // pred_check_branch
          %310 = sbr.rel (%p308) target = $region20
        $region19: #{tpu_custom_call.1} parent=11 // pred_region
          _
        $region20: #{tpu_custom_call.1} parent=11 // pred_fallthru
          _
        // Predicated region
        $region21: #{tpu_custom_call.1} parent=11 // pred_check
          %p311 = pneg %p190
        $region22: #{tpu_custom_call.1} parent=11 // pred_check_branch
          %313 = sbr.rel (%p311) target = $region24
        $region23: #{tpu_custom_call.1} parent=11 // pred_region
          %315 = vsyncadd [#allocation10], 0
          %s316 = sshll.u32 %s5, 4
          %s317 = int_to_ptr.hbm [resolvable:$true] %s316
          %s318 = sshll.u32 [#allocation9], 4
          %s319 = int_to_ptr.vmem [resolvable:$true] %s318
          %324 = dma.hbm_to_vmem [thread:$0]  %s317, 512, %s319, [#allocation10], 128, 128, 8
        $region24: #{tpu_custom_call.1} parent=11 // pred_fallthru
          _
        // Predicated region
        $region25: #{tpu_custom_call.1} parent=11 // pred_check
          %p325 = pneg %p211
        $region26: #{tpu_custom_call.1} parent=11 // pred_check_branch
          %327 = sbr.rel (%p325) target = $region28
        $region27: #{tpu_custom_call.1} parent=11 // pred_region
          _
        $region28: #{tpu_custom_call.1} parent=11 // pred_fallthru
          _
        // Predicated region
        $region29: #{tpu_custom_call.1} parent=11 // pred_check
          %p328 = pneg %p232
        $region30: #{tpu_custom_call.1} parent=11 // pred_check_branch
          %330 = sbr.rel (%p328) target = $region32
        $region31: #{tpu_custom_call.1} parent=11 // pred_region
          %332 = vsyncadd [#allocation10], 0
          %s333 = sshll.u32 %s7, 4
          %s334 = int_to_ptr.hbm [resolvable:$true] %s333
          %s335 = sshll.u32 [#allocation11], 4
          %s336 = int_to_ptr.vmem [resolvable:$true] %s335
          %341 = dma.hbm_to_vmem [thread:$0]  %s334, 2048, %s336, [#allocation10], 128, 128, 8
        $region32: #{tpu_custom_call.1} parent=11 // pred_fallthru
          _
        // Predicated region
        $region33: #{tpu_custom_call.1} parent=11 // pred_check
          %p342 = pneg %p253
        $region34: #{tpu_custom_call.1} parent=11 // pred_check_branch
          %344 = sbr.rel (%p342) target = $region36
        $region35: #{tpu_custom_call.1} parent=11 // pred_region
          _
        $region36: #{tpu_custom_call.1} parent=11 // pred_fallthru
          _
      $region12: #{tpu_custom_call.1} parent=5 // pred_fallthru
        _
      %p345 = scmp.lt.s32.totalorder %s25, 2
      // Predicated region
      $region37: #{tpu_custom_call.1} parent=5 // pred_check
        %p346 = pneg %p345
      $region38: #{tpu_custom_call.1} parent=5 // pred_check_branch
        %348 = sbr.rel (%p346) target = $region40
      $region39: #{tpu_custom_call.1} parent=5 // pred_region
        // Predicated region
        $region41: #{tpu_custom_call.1} parent=39 // pred_check
          %p349 = pneg %p59
        $region42: #{tpu_custom_call.1} parent=39 // pred_check_branch
          %351 = sbr.rel (%p349) target = $region44
        $region43: #{tpu_custom_call.1} parent=39 // pred_region
          %s352 = sand.u32 %s49, 1
          %s353 = scalar_lea.sflag [#allocation4], %s352
          %s354 = sand.u32 %s49, 1
          %s355 = smul.addr %s354, 16
          %s356 = scalar_lea.vmem [#allocation3], %s355
          %s357 = smul.u32 2, %s33
          %359 = vsyncadd %s353, 0
          %s360 = smul.addr %s32, 4
          %s361 = sadd.s32 %s357, %s360
          %s362 = smul.addr %s361, 4
          %s363 = scalar_lea.hbm %s0, %s362
          %s364 = sshll.u32 %s363, 4
          %s365 = int_to_ptr.hbm [resolvable:$true] %s364
          %s366 = sshll.u32 %s356, 4
          %s367 = int_to_ptr.vmem [resolvable:$true] %s366
          %372 = dma.hbm_to_vmem [thread:$0]  %s365, 256, %s367, %s353, 64, 64, 4
        $region44: #{tpu_custom_call.1} parent=39 // pred_fallthru
          _
        // Predicated region
        $region45: #{tpu_custom_call.1} parent=39 // pred_check
          %p373 = pneg %p95
        $region46: #{tpu_custom_call.1} parent=39 // pred_check_branch
          %375 = sbr.rel (%p373) target = $region48
        $region47: #{tpu_custom_call.1} parent=39 // pred_region
          %s376 = sand.u32 %s25, 1
          %s377 = scalar_lea.sflag [#allocation7], %s376
          %s378 = sand.u32 %s85, 1
          %s379 = smul.addr %s378, 8
          %s380 = scalar_lea.vmem [#allocation6], %s379
          %s381 = sadd.s32 %s33, 1
          %s382 = smul.u32 %s381, 2
          %p383 = scmp.lt.s32.totalorder %s382, 1
          %s384 = scalar_select %p383, %s382, 1
          %386 = vsyncadd %s377, 0
          %s387 = smul.addr %s32, 4
          %s388 = sadd.s32 %s384, %s387
          %s389 = smul.addr %s388, 4
          %s390 = scalar_lea.hbm %s1, %s389
          %s391 = sshll.u32 %s390, 4
          %s392 = int_to_ptr.hbm [resolvable:$true] %s391
          %s393 = sshll.u32 %s380, 4
          %s394 = int_to_ptr.vmem [resolvable:$true] %s393
          %399 = dma.hbm_to_vmem [thread:$0]  %s392, 128, %s394, %s377, 128, 64, 4
        $region48: #{tpu_custom_call.1} parent=39 // pred_fallthru
          _
        // Predicated region
        $region49: #{tpu_custom_call.1} parent=39 // pred_check
          %p400 = pneg %p121
        $region50: #{tpu_custom_call.1} parent=39 // pred_check_branch
          %402 = sbr.rel (%p400) target = $region52
        $region51: #{tpu_custom_call.1} parent=39 // pred_region
          %p403 = scmp.lt.s32.totalorder %s32, 1
          %s404 = scalar_select %p403, %s32, 1
          %s405 = smul.addr %s404, 2
          %s406 = scalar_lea.vmem %s2, %s405
        $region52: #{tpu_custom_call.1} parent=39 // pred_fallthru
          _
      $region40: #{tpu_custom_call.1} parent=5 // pred_fallthru
        _
      %p407 = scmp.le.s32.totalorder 1, %s25
      %p408 = scmp.lt.s32.totalorder %s25, 3
      %p409 = pnand %p407, %p408
      %p410 = pneg %p409
      // Predicated region
      $region53: #{tpu_custom_call.1} parent=5 // pred_check
        _
      $region54: #{tpu_custom_call.1} parent=5 // pred_check_branch
        %412 = sbr.rel (%p409) target = $region56
      $region55: #{tpu_custom_call.1} parent=5 // pred_region
        %s413 = ssub.s32 %s25, 1
        %s414 = sand.u32 %s52, 1
        %s415 = scalar_lea.sflag [#allocation4], %s414
        %s416 = sand.u32 %s52, 1
        %s417 = smul.addr %s416, 16
        %s418 = scalar_lea.vmem [#allocation3], %s417
        // Predicated region
        $region57: #{tpu_custom_call.1} parent=55 // pred_check
          %p419 = pneg %p65
        $region58: #{tpu_custom_call.1} parent=55 // pred_check_branch
          %421 = sbr.rel (%p419) target = $region60
        $region59: #{tpu_custom_call.1} parent=55 // pred_region
          %423 = dma.done %s415, 256
        $region60: #{tpu_custom_call.1} parent=55 // pred_fallthru
          _
        %s424 = sand.u32 %s30, 1
        %s425 = scalar_lea.sflag [#allocation7], %s424
        %s426 = sand.u32 %s88, 1
        %s427 = smul.addr %s426, 8
        %s428 = scalar_lea.vmem [#allocation6], %s427
        // Predicated region
        $region61: #{tpu_custom_call.1} parent=55 // pred_check
          %p429 = pneg %p101
        $region62: #{tpu_custom_call.1} parent=55 // pred_check_branch
          %431 = sbr.rel (%p429) target = $region64
        $region63: #{tpu_custom_call.1} parent=55 // pred_region
          %433 = dma.done %s425, 128
        $region64: #{tpu_custom_call.1} parent=55 // pred_fallthru
          _
        // Predicated region
        $region65: #{tpu_custom_call.1} parent=55 // pred_check
          %p434 = pneg %p148
        $region66: #{tpu_custom_call.1} parent=55 // pred_check_branch
          %436 = sbr.rel (%p434) target = $region68
        $region67: #{tpu_custom_call.1} parent=55 // pred_region
          %438 = dma.done [#allocation7], 1792
        $region68: #{tpu_custom_call.1} parent=55 // pred_fallthru
          _
        // Predicated region
        $region69: #{tpu_custom_call.1} parent=55 // pred_check
          %p439 = pneg %p190
        $region70: #{tpu_custom_call.1} parent=55 // pred_check_branch
          %441 = sbr.rel (%p439) target = $region72
        $region71: #{tpu_custom_call.1} parent=55 // pred_region
          %443 = dma.done [#allocation10], 512
        $region72: #{tpu_custom_call.1} parent=55 // pred_fallthru
          _
        // Predicated region
        $region73: #{tpu_custom_call.1} parent=55 // pred_check
          %p444 = pneg %p232
        $region74: #{tpu_custom_call.1} parent=55 // pred_check_branch
          %446 = sbr.rel (%p444) target = $region76
        $region75: #{tpu_custom_call.1} parent=55 // pred_region
          %448 = dma.done [#allocation10], 2048
        $region76: #{tpu_custom_call.1} parent=55 // pred_fallthru
          _
        %s449 = sand.u32 %s52, 1
        %s450 = scalar_lea.sflag [#allocation4], %s449
        %s451 = sand.u32 %s52, 1
        %s452 = smul.addr %s451, 16
        %s453 = scalar_lea.vmem [#allocation3], %s452
        %p454 = pneg %p65
        %p455 = pneg %p62
        %s456 = sand.u32 %s30, 1
        %s457 = scalar_lea.sflag [#allocation7], %s456
        %s458 = sand.u32 %s88, 1
        %s459 = smul.addr %s458, 8
        %s460 = scalar_lea.vmem [#allocation6], %s459
        %p461 = pneg %p101
        %p462 = pneg %p98
        %p463 = scmp.lt.s32.totalorder %s34, 1
        %s464 = scalar_select %p463, %s34, 1
        %s465 = smul.addr %s464, 2
        %s466 = scalar_lea.vmem %s2, %s465
        %p467 = pneg %p127
        %p468 = pneg %p124
        %p469 = pneg %p148
        %p470 = pneg %p145
        %p471 = pneg %p169
        %p472 = pneg %p166
        %p473 = pneg %p190
        %p474 = pneg %p187
        %p475 = pneg %p211
        %p476 = pneg %p208
        %p477 = pneg %p232
        %p478 = pneg %p229
        %p479 = pneg %p253
        %p480 = pneg %p250
        %p481 = pneg %p279
        %p482 = pneg %p276
        %s483 = sand.u32 %s266, 1
        %s484 = scalar_lea.sflag [#allocation5], %s483
        %s485 = sand.u32 %s266, 1
        %s486 = smul.addr %s485, 2
        %s487 = scalar_lea.vmem [#allocation12], %s486
        %s488 = smul.u32 2, %s35
        %s489 = sadd.s32 %s35, 1
        %s490 = smul.u32 %s489, 2
        %p491 = scmp.lt.s32.totalorder %s490, 1
        %s492 = scalar_select %p491, %s490, 1
        %p493 = scmp.lt.s32.totalorder %s34, 1
        %s494 = scalar_select %p493, %s34, 1
        %s495 = smul.addr %s494, 2
        %s496 = scalar_lea.vmem %s2, %s495
        %p498 = scmp.eq.s32.totalorder %s35, 0
        // Predicated region
        $region77: #{tpu_custom_call.1} parent=55 // pred_check
          %p499 = pneg %p498
        $region78: #{tpu_custom_call.1} parent=55 // pred_check_branch
          %501 = sbr.rel (%p499) target = $region80
        $region79: #{tpu_custom_call.1} parent=55 // pred_region
          %vm502 = vcmask 254976
          %503 = vst.msk [vmem:[#allocation2] sm:$0x3] %vm502, 0.0
        $region80: #{tpu_custom_call.1} parent=55 // pred_fallthru
          _
        %s504 = smul.u32 %s35, 16
        %p505 = scmp.lt.s32.totalorder %s504, 10
        // Predicated region
        $region81: #{tpu_custom_call.1} parent=55 // pred_check
          %p506 = pneg %p505
        $region82: #{tpu_custom_call.1} parent=55 // pred_check_branch
          %508 = sbr.rel (%p506) target = $region84
        $region83: #{tpu_custom_call.1} parent=55 // pred_region
          %v509 = vld [vmem:[%s418] sm:$0xf]
          %v510 = vld [vmem:[%s418 + $0x4] sm:$0xf]
          %v511 = vld [vmem:[%s418 + $0x8] sm:$0xf]
          %v512 = vld [vmem:[%s418 + $0xc] sm:$0xf]
          %v513 = vld [vmem:[%s428] sm:$0xf]
          %v514 = vld [vmem:[%s428 + $0x4] sm:$0xf]
          %v519 = vunpack.c.l.b16 %v509
          %v520 = vunpack.c.l.b16 %v510
          %v521 = vunpack.c.l.b16 %v511
          %v522 = vunpack.c.l.b16 %v512
          %v523 = vpack.c.b16 %v520, %v519
          %v524 = vpack.c.b16 %v522, %v521
          %v525 = vld [vmem:[#allocation8] sm:$0xf]
          %v526 = vld [vmem:[#allocation8 + $0x4] sm:$0xf]
          %v527 = vld [vmem:[#allocation8 + $0x8] sm:$0xf]
          %v528 = vld [vmem:[#allocation8 + $0xc] sm:$0xf]
          %s529 = scalar_lea.vmem [#allocation8], 16
          %v530 = vld [vmem:[%s529] sm:$0xf]
          %v531 = vld [vmem:[%s529 + $0x4] sm:$0xf]
          %v532 = vld [vmem:[%s529 + $0x8] sm:$0xf]
          %v533 = vld [vmem:[%s529 + $0xc] sm:$0xf]
          %vm534 = vsmask.f32 7424
          %v536 = vshrl.u32 %v523, 16
          %v538 = vshll.u32 %v523, 16
          %v540 = vrot.slane %v538, 1
          %v541 = vor.u32 %v536, %v540
          %v543 = vshll.u32 %v513, 16
          %v545 = vrot.slane %v543, 1
          %v546 = vsel %vm534, %v541, %v545
          %v548 = vshrl.u32 %v524, 16
          %v550 = vshll.u32 %v524, 16
          %v552 = vrot.slane %v550, 1
          %v553 = vor.u32 %v548, %v552
          %v555 = vshll.u32 %v514, 16
          %v557 = vrot.slane %v555, 1
          %v558 = vsel %vm534, %v553, %v557
          %v563 = vunpack.c.l.b16 %v530
          %v564 = vunpack.c.l.b16 %v531
          %v565 = vunpack.c.l.b16 %v532
          %v566 = vunpack.c.l.b16 %v533
          %v567 = vpack.c.b16 %v564, %v563
          %v568 = vpack.c.b16 %v566, %v565
          %vm571 = vcmask 261120
          %v573 = vsel %vm571, %v546, 0
          %v576 = vsel %vm571, %v558, 0
          %578 = vmatpush.bf16.msra.mxu0 0
          %579 = vmatpush.bf16.msra.mxu0 0
          %580 = vmatpush.bf16.msra.mxu0 0
          %581 = vmatpush.bf16.msra.mxu0 0
          %582 = vmatpush.bf16.msra.mxu0 0
          %583 = vmatpush.bf16.msra.mxu0 0
          %584 = vmatpush.bf16.msra.mxu0 %v568
          %585 = vmatpush.bf16.msra.mxu0 %v567
          %586 = vmatmul.bf16.gmra.mxu0 %v573
          %v587 = vpop.f32.mrf.mxu0
          %v588 = vadd.f32 0.0, %v587
          %v589 = vpop.f32.mrf.mxu0
          %v590 = vadd.f32 0.0, %v589
          %591 = vmatmul.bf16.gmra.mxu0 %v576
          %v592 = vpop.f32.mrf.mxu0
          %v593 = vadd.f32 0.0, %v592
          %v594 = vpop.f32.mrf.mxu0
          %v595 = vadd.f32 0.0, %v594
          %596 = vdwg.mxu0
          %v601 = vunpack.c.l.b16 %v525
          %v602 = vunpack.c.l.b16 %v526
          %v603 = vunpack.c.l.b16 %v527
          %v604 = vunpack.c.l.b16 %v528
          %v605 = vpack.c.b16 %v602, %v601
          %v606 = vpack.c.b16 %v604, %v603
          %v609 = vsel %vm571, %v523, 0
          %v611 = vsel %vm571, %v524, 0
          %613 = vmatpush.bf16.msra.mxu0 0
          %614 = vmatpush.bf16.msra.mxu0 0
          %615 = vmatpush.bf16.msra.mxu0 0
          %616 = vmatpush.bf16.msra.mxu0 0
          %617 = vmatpush.bf16.msra.mxu0 0
          %618 = vmatpush.bf16.msra.mxu0 0
          %619 = vmatpush.bf16.msra.mxu0 %v606
          %620 = vmatpush.bf16.msra.mxu0 %v605
          %621 = vmatmul.bf16.gmra.mxu0 %v609
          %v622 = vpop.f32.mrf.mxu0
          %v623 = vadd.f32 %v588, %v622
          %v624 = vpop.f32.mrf.mxu0
          %v625 = vadd.f32 %v590, %v624
          %626 = vmatmul.bf16.gmra.mxu0 %v611
          %v627 = vpop.f32.mrf.mxu0
          %v628 = vadd.f32 %v593, %v627
          %v629 = vpop.f32.mrf.mxu0
          %v630 = vadd.f32 %v595, %v629
          %631 = vdwg.mxu0
          %s632 = scalar_lea.vmem [#allocation8], 32
          %v633 = vld [vmem:[%s632] sm:$0xf]
          %v634 = vld [vmem:[%s632 + $0x4] sm:$0xf]
          %v635 = vld [vmem:[%s632 + $0x8] sm:$0xf]
          %v636 = vld [vmem:[%s632 + $0xc] sm:$0xf]
          %vm639 = vcmask 1046528
          %v640 = vrot.slane %v523, 1
          %v641 = vrot.slane %v513, 1
          %v642 = vsel %vm639, %v640, %v641
          %v643 = vrot.slane %v524, 1
          %v644 = vrot.slane %v514, 1
          %v645 = vsel %vm639, %v643, %v644
          %v650 = vunpack.c.l.b16 %v633
          %v651 = vunpack.c.l.b16 %v634
          %v652 = vunpack.c.l.b16 %v635
          %v653 = vunpack.c.l.b16 %v636
          %v654 = vpack.c.b16 %v651, %v650
          %v655 = vpack.c.b16 %v653, %v652
          %v659 = vsel %vm571, %v642, 0
          %v662 = vsel %vm571, %v645, 0
          %664 = vmatpush.bf16.msra.mxu0 0
          %665 = vmatpush.bf16.msra.mxu0 0
          %666 = vmatpush.bf16.msra.mxu0 0
          %667 = vmatpush.bf16.msra.mxu0 0
          %668 = vmatpush.bf16.msra.mxu0 0
          %669 = vmatpush.bf16.msra.mxu0 0
          %670 = vmatpush.bf16.msra.mxu0 %v655
          %671 = vmatpush.bf16.msra.mxu0 %v654
          %672 = vmatmul.bf16.gmra.mxu0 %v659
          %v673 = vpop.f32.mrf.mxu0
          %v674 = vadd.f32 0.0, %v673
          %v675 = vpop.f32.mrf.mxu0
          %v676 = vadd.f32 0.0, %v675
          %677 = vmatmul.bf16.gmra.mxu0 %v662
          %v678 = vpop.f32.mrf.mxu0
          %v679 = vadd.f32 0.0, %v678
          %v680 = vpop.f32.mrf.mxu0
          %v681 = vadd.f32 0.0, %v680
          %682 = vdwg.mxu0
          %v683 = vadd.f32 %v623, %v674
          %v684 = vadd.f32 %v625, %v676
          %v685 = vadd.f32 %v628, %v679
          %v686 = vadd.f32 %v630, %v681
          %s687 = scalar_lea.vmem [#allocation8], 48
          %v688 = vld [vmem:[%s687] sm:$0xf]
          %v689 = vld [vmem:[%s687 + $0x4] sm:$0xf]
          %v690 = vld [vmem:[%s687 + $0x8] sm:$0xf]
          %v691 = vld [vmem:[%s687 + $0xc] sm:$0xf]
          %vm692 = vsmask.f32 6400
          %v693 = vrot.slane %v536, 1
          %v694 = vrot.slane %v538, 2
          %v695 = vor.u32 %v693, %v694
          %v696 = vshrl.u32 %v513, 16
          %v698 = vrot.slane %v696, 1
          %v699 = vrot.slane %v543, 2
          %v700 = vor.u32 %v698, %v699
          %v701 = vsel %vm692, %v695, %v700
          %v702 = vrot.slane %v548, 1
          %v703 = vrot.slane %v550, 2
          %v704 = vor.u32 %v702, %v703
          %v705 = vshrl.u32 %v514, 16
          %v707 = vrot.slane %v705, 1
          %v708 = vrot.slane %v555, 2
          %v709 = vor.u32 %v707, %v708
          %v710 = vsel %vm692, %v704, %v709
          %v715 = vunpack.c.l.b16 %v688
          %v716 = vunpack.c.l.b16 %v689
          %v717 = vunpack.c.l.b16 %v690
          %v718 = vunpack.c.l.b16 %v691
          %v719 = vpack.c.b16 %v716, %v715
          %v720 = vpack.c.b16 %v718, %v717
          %v724 = vsel %vm571, %v701, 0
          %v727 = vsel %vm571, %v710, 0
          %729 = vmatpush.bf16.msra.mxu0 0
          %730 = vmatpush.bf16.msra.mxu0 0
          %731 = vmatpush.bf16.msra.mxu0 0
          %732 = vmatpush.bf16.msra.mxu0 0
          %733 = vmatpush.bf16.msra.mxu0 0
          %734 = vmatpush.bf16.msra.mxu0 0
          %735 = vmatpush.bf16.msra.mxu0 %v720
          %736 = vmatpush.bf16.msra.mxu0 %v719
          %737 = vmatmul.bf16.gmra.mxu0 %v724
          %v738 = vpop.f32.mrf.mxu0
          %v739 = vadd.f32 0.0, %v738
          %v740 = vpop.f32.mrf.mxu0
          %v741 = vadd.f32 0.0, %v740
          %742 = vmatmul.bf16.gmra.mxu0 %v727
          %v743 = vpop.f32.mrf.mxu0
          %v744 = vadd.f32 0.0, %v743
          %v745 = vpop.f32.mrf.mxu0
          %v746 = vadd.f32 0.0, %v745
          %747 = vdwg.mxu0
          %v748 = vadd.f32 %v683, %v739
          %v749 = vadd.f32 %v684, %v741
          %v750 = vadd.f32 %v685, %v744
          %v751 = vadd.f32 %v686, %v746
          %s752 = scalar_lea.vmem [#allocation8], 64
          %v753 = vld [vmem:[%s752] sm:$0xf]
          %v754 = vld [vmem:[%s752 + $0x4] sm:$0xf]
          %v755 = vld [vmem:[%s752 + $0x8] sm:$0xf]
          %v756 = vld [vmem:[%s752 + $0xc] sm:$0xf]
          %vm757 = vcmask 1045504
          %v758 = vrot.slane %v523, 2
          %v759 = vrot.slane %v513, 2
          %v760 = vsel %vm757, %v758, %v759
          %v761 = vrot.slane %v524, 2
          %v762 = vrot.slane %v514, 2
          %v763 = vsel %vm757, %v761, %v762
          %v768 = vunpack.c.l.b16 %v753
          %v769 = vunpack.c.l.b16 %v754
          %v770 = vunpack.c.l.b16 %v755
          %v771 = vunpack.c.l.b16 %v756
          %v772 = vpack.c.b16 %v769, %v768
          %v773 = vpack.c.b16 %v771, %v770
          %v777 = vsel %vm571, %v760, 0
          %v780 = vsel %vm571, %v763, 0
          %782 = vmatpush.bf16.msra.mxu0 0
          %783 = vmatpush.bf16.msra.mxu0 0
          %784 = vmatpush.bf16.msra.mxu0 0
          %785 = vmatpush.bf16.msra.mxu0 0
          %786 = vmatpush.bf16.msra.mxu0 0
          %787 = vmatpush.bf16.msra.mxu0 0
          %788 = vmatpush.bf16.msra.mxu0 %v773
          %789 = vmatpush.bf16.msra.mxu0 %v772
          %790 = vmatmul.bf16.gmra.mxu0 %v777
          %v791 = vpop.f32.mrf.mxu0
          %v792 = vadd.f32 0.0, %v791
          %v793 = vpop.f32.mrf.mxu0
          %v794 = vadd.f32 0.0, %v793
          %795 = vmatmul.bf16.gmra.mxu0 %v780
          %v796 = vpop.f32.mrf.mxu0
          %v797 = vadd.f32 0.0, %v796
          %v798 = vpop.f32.mrf.mxu0
          %v799 = vadd.f32 0.0, %v798
          %800 = vdwg.mxu0
          %v801 = vadd.f32 %v748, %v792
          %v802 = vadd.f32 %v749, %v794
          %v803 = vadd.f32 %v750, %v797
          %v804 = vadd.f32 %v751, %v799
          %s805 = scalar_lea.vmem [#allocation8], 80
          %v806 = vld [vmem:[%s805] sm:$0xf]
          %v807 = vld [vmem:[%s805 + $0x4] sm:$0xf]
          %v808 = vld [vmem:[%s805 + $0x8] sm:$0xf]
          %v809 = vld [vmem:[%s805 + $0xc] sm:$0xf]
          %vm810 = vsmask.f32 5376
          %v811 = vrot.slane %v536, 2
          %v812 = vrot.slane %v538, 3
          %v813 = vor.u32 %v811, %v812
          %v814 = vrot.slane %v696, 2
          %v815 = vrot.slane %v543, 3
          %v816 = vor.u32 %v814, %v815
          %v817 = vsel %vm810, %v813, %v816
          %v818 = vrot.slane %v548, 2
          %v819 = vrot.slane %v550, 3
          %v820 = vor.u32 %v818, %v819
          %v821 = vrot.slane %v705, 2
          %v822 = vrot.slane %v555, 3
          %v823 = vor.u32 %v821, %v822
          %v824 = vsel %vm810, %v820, %v823
          %v829 = vunpack.c.l.b16 %v806
          %v830 = vunpack.c.l.b16 %v807
          %v831 = vunpack.c.l.b16 %v808
          %v832 = vunpack.c.l.b16 %v809
          %v833 = vpack.c.b16 %v830, %v829
          %v834 = vpack.c.b16 %v832, %v831
          %v838 = vsel %vm571, %v817, 0
          %v841 = vsel %vm571, %v824, 0
          %843 = vmatpush.bf16.msra.mxu0 0
          %844 = vmatpush.bf16.msra.mxu0 0
          %845 = vmatpush.bf16.msra.mxu0 0
          %846 = vmatpush.bf16.msra.mxu0 0
          %847 = vmatpush.bf16.msra.mxu0 0
          %848 = vmatpush.bf16.msra.mxu0 0
          %849 = vmatpush.bf16.msra.mxu0 %v834
          %850 = vmatpush.bf16.msra.mxu0 %v833
          %851 = vmatmul.bf16.gmra.mxu0 %v838
          %v852 = vpop.f32.mrf.mxu0
          %v853 = vadd.f32 0.0, %v852
          %v854 = vpop.f32.mrf.mxu0
          %v855 = vadd.f32 0.0, %v854
          %856 = vmatmul.bf16.gmra.mxu0 %v841
          %v857 = vpop.f32.mrf.mxu0
          %v858 = vadd.f32 0.0, %v857
          %v859 = vpop.f32.mrf.mxu0
          %v860 = vadd.f32 0.0, %v859
          %861 = vdwg.mxu0
          %v862 = vadd.f32 %v801, %v853
          %v863 = vadd.f32 %v802, %v855
          %v864 = vadd.f32 %v803, %v858
          %v865 = vadd.f32 %v804, %v860
          %s866 = scalar_lea.vmem [#allocation8], 96
          %v867 = vld [vmem:[%s866] sm:$0xf]
          %v868 = vld [vmem:[%s866 + $0x4] sm:$0xf]
          %v869 = vld [vmem:[%s866 + $0x8] sm:$0xf]
          %v870 = vld [vmem:[%s866 + $0xc] sm:$0xf]
          %vm871 = vcmask 1044480
          %v872 = vrot.slane %v523, 3
          %v873 = vrot.slane %v513, 3
          %v874 = vsel %vm871, %v872, %v873
          %v875 = vrot.slane %v524, 3
          %v876 = vrot.slane %v514, 3
          %v877 = vsel %vm871, %v875, %v876
          %v882 = vunpack.c.l.b16 %v867
          %v883 = vunpack.c.l.b16 %v868
          %v884 = vunpack.c.l.b16 %v869
          %v885 = vunpack.c.l.b16 %v870
          %v886 = vpack.c.b16 %v883, %v882
          %v887 = vpack.c.b16 %v885, %v884
          %v891 = vsel %vm571, %v874, 0
          %v894 = vsel %vm571, %v877, 0
          %896 = vmatpush.bf16.msra.mxu0 0
          %897 = vmatpush.bf16.msra.mxu0 0
          %898 = vmatpush.bf16.msra.mxu0 0
          %899 = vmatpush.bf16.msra.mxu0 0
          %900 = vmatpush.bf16.msra.mxu0 0
          %901 = vmatpush.bf16.msra.mxu0 0
          %902 = vmatpush.bf16.msra.mxu0 %v887
          %903 = vmatpush.bf16.msra.mxu0 %v886
          %904 = vmatmul.bf16.gmra.mxu0 %v891
          %v905 = vpop.f32.mrf.mxu0
          %v906 = vadd.f32 0.0, %v905
          %v907 = vpop.f32.mrf.mxu0
          %v908 = vadd.f32 0.0, %v907
          %909 = vmatmul.bf16.gmra.mxu0 %v894
          %v910 = vpop.f32.mrf.mxu0
          %v911 = vadd.f32 0.0, %v910
          %v912 = vpop.f32.mrf.mxu0
          %v913 = vadd.f32 0.0, %v912
          %914 = vdwg.mxu0
          %v915 = vadd.f32 %v862, %v906
          %v916 = vadd.f32 %v863, %v908
          %v917 = vadd.f32 %v864, %v911
          %v918 = vadd.f32 %v865, %v913
          %v919 = vld [vmem:[%s4] sm:$0x1]
          %v921 = vperm.slane %v919, 0
          %v923 = vadd.f32 %v915, %v921
          %v924 = vadd.f32 %v916, %v921
          %v925 = vadd.f32 %v917, %v921
          %v926 = vadd.f32 %v918, %v921
          %v927 = vmax.f32 %v923, 0.0
          %v928 = vmax.f32 %v924, 0.0
          %v929 = vmax.f32 %v925, 0.0
          %v930 = vmax.f32 %v926, 0.0
          %s931 = sadd.s32 %s35, 1
          %s932 = smul.u32 %s931, 16
          %p933 = scmp.gt.s32.totalorder %s932, 10
          %p934 = scmp.le.s32.totalorder %s932, 10
          // Predicated region
          $region85: #{tpu_custom_call.1} parent=83 // pred_check
            %p935 = pneg %p934
          $region86: #{tpu_custom_call.1} parent=83 // pred_check_branch
            %937 = sbr.rel (%p935) target = $region88
          $region87: #{tpu_custom_call.1} parent=83 // pred_region
            %v938 = vld [vmem:[#allocation2] sm:$0x3]
            %v939 = vsel %vm571, %v927, 0.0
            %v940 = vsel %vm571, %v928, 0.0
            %v941 = vadd.f32 %v939, %v940
            %v942 = vrot.slane %v941, 4
            %v943 = vadd.f32 %v941, %v942
            %v944 = vrot.slane %v943, 2
            %v945 = vadd.f32 %v943, %v944
            %v946 = vrot.slane %v945, 1
            %v947 = vadd.f32 %v945, %v946
            %v948 = vsel %vm571, %v929, 0.0
            %v949 = vsel %vm571, %v930, 0.0
            %v950 = vadd.f32 %v948, %v949
            %v951 = vrot.slane %v950, 4
            %v952 = vadd.f32 %v950, %v951
            %v953 = vrot.slane %v952, 2
            %v954 = vadd.f32 %v952, %v953
            %v955 = vrot.slane %v954, 1
            %v956 = vadd.f32 %v954, %v955
            %vm959 = vcmask 1041409
            %v960 = vsel %vm959, %v956, %v947
            %v962 = vadd.f32 %v938, %v960
            %vm963 = vcmask 254976
            %964 = vst.msk [vmem:[#allocation2] sm:$0x3] %vm963, %v962
          $region88: #{tpu_custom_call.1} parent=83 // pred_fallthru
            _
          // Predicated region
          $region89: #{tpu_custom_call.1} parent=83 // pred_check
            %p965 = pneg %p933
          $region90: #{tpu_custom_call.1} parent=83 // pred_check_branch
            %967 = sbr.rel (%p965) target = $region92
          $region91: #{tpu_custom_call.1} parent=83 // pred_region
            %v968 = vlaneseq
            %v969 = vshrl.u32 %v968, 7
            %v970 = vadd.s32 %v969, 8
            %v971 = vstv %s504
            %v972 = vadd.s32 %v971, %v969
            %v973 = vadd.s32 %v971, %v970
            %v974 = vld [vmem:[#allocation2] sm:$0x3]
            %vm975 = vcmp.lt.s32.totalorder %v972, 10
            %vm976 = vcmp.lt.s32.totalorder %v973, 10
            %v977 = vsel %vm975, 1, 0
            %v978 = vsel %vm976, 1, 0
            %vm979 = vcmp.eq.s32.totalorder %v977, 1
            %vm980 = vcmp.eq.s32.totalorder %v978, 1
            %v981 = vsel %vm979, %v927, 0.0
            %v982 = vsel %vm980, %v928, 0.0
            %v983 = vsel %vm979, %v929, 0.0
            %v984 = vsel %vm980, %v930, 0.0
            %v985 = vsel %vm571, %v981, 0.0
            %v986 = vsel %vm571, %v982, 0.0
            %v987 = vadd.f32 %v985, %v986
            %v988 = vrot.slane %v987, 4
            %v989 = vadd.f32 %v987, %v988
            %v990 = vrot.slane %v989, 2
            %v991 = vadd.f32 %v989, %v990
            %v992 = vrot.slane %v991, 1
            %v993 = vadd.f32 %v991, %v992
            %v994 = vsel %vm571, %v983, 0.0
            %v995 = vsel %vm571, %v984, 0.0
            %v996 = vadd.f32 %v994, %v995
            %v997 = vrot.slane %v996, 4
            %v998 = vadd.f32 %v996, %v997
            %v999 = vrot.slane %v998, 2
            %v1000 = vadd.f32 %v998, %v999
            %v1001 = vrot.slane %v1000, 1
            %v1002 = vadd.f32 %v1000, %v1001
            %vm1005 = vcmask 1041409
            %v1006 = vsel %vm1005, %v1002, %v993
            %v1008 = vadd.f32 %v974, %v1006
            %vm1009 = vcmask 254976
            %1010 = vst.msk [vmem:[#allocation2] sm:$0x3] %vm1009, %v1008
          $region92: #{tpu_custom_call.1} parent=83 // pred_fallthru
            _
        $region84: #{tpu_custom_call.1} parent=55 // pred_fallthru
          _
        // Predicated region
        $region93: #{tpu_custom_call.1} parent=55 // pred_check
          %p1011 = pneg %p498
        $region94: #{tpu_custom_call.1} parent=55 // pred_check_branch
          %1013 = sbr.rel (%p1011) target = $region96
        $region95: #{tpu_custom_call.1} parent=55 // pred_region
          %v1014 = vld [vmem:[#allocation2] sm:$0x3]
          %v1015 = vld [vmem:[%s496] sm:$0x3]
          %1017 = vset.pattern.permute.xlu0 0
          %1018 = vperm.xlu0 %1017, %v1015
          %v1019 = vpop.permute.xlu0 %1018
          %v1021 = vmul.f32 %v1014, %v1019
          %v1022 = vld [vmem:[#allocation9] sm:$0xff]
          %v1023 = vld [vmem:[#allocation9 + $0x8] sm:$0xff]
          %v1024 = vld [vmem:[#allocation9 + $0x10] sm:$0xff]
          %v1025 = vld [vmem:[#allocation9 + $0x18] sm:$0xff]
          %v1026 = vld [vmem:[%s6] sm:$0x1]
          %v1028 = vperm.slane %v1026, 0
          %vm1030 = vcmask 261120
          %v1032 = vsel %vm1030, %v1021, 0
          %1034 = vmatpush.msra.mxu0 0.0
          %1035 = vmatpush.msra.mxu0 0.0
          %1036 = vmatpush.msra.mxu0 0.0
          %1037 = vmatpush.msra.mxu0 0.0
          %1038 = vmatpush.msra.mxu0 0.0
          %1039 = vmatpush.msra.mxu0 0.0
          %1040 = vmatpush.msra.mxu0 0.0
          %1041 = vmatpush.msra.mxu0 0.0
          %1042 = vmatpush.msra.mxu0 0.0
          %1043 = vmatpush.msra.mxu0 0.0
          %1044 = vmatpush.msra.mxu0 0.0
          %1045 = vmatpush.msra.mxu0 0.0
          %1046 = vmatpush.msra.mxu0 %v1025
          %1047 = vmatpush.msra.mxu0 %v1024
          %1048 = vmatpush.msra.mxu0 %v1023
          %1049 = vmatpush.msra.mxu0 %v1022
          %1050 = vmatmul.f32.gmra.mxu0 %v1032
          %v1051 = vpop.f32.mrf.mxu0
          %v1052 = vadd.f32 %v1028, %v1051
          %1053 = vdwg.mxu0
          %v1054 = vmax.f32 %v1052, 0.0
          %v1055 = vld [vmem:[#allocation11] sm:$0xff]
          %v1056 = vld [vmem:[#allocation11 + $0x8] sm:$0xff]
          %v1057 = vld [vmem:[#allocation11 + $0x10] sm:$0xff]
          %v1058 = vld [vmem:[#allocation11 + $0x18] sm:$0xff]
          %v1059 = vld [vmem:[#allocation11 + $0x20] sm:$0xff]
          %v1060 = vld [vmem:[#allocation11 + $0x28] sm:$0xff]
          %v1061 = vld [vmem:[#allocation11 + $0x30] sm:$0xff]
          %v1062 = vld [vmem:[#allocation11 + $0x38] sm:$0xff]
          %v1063 = vld [vmem:[#allocation11 + $0x40] sm:$0xff]
          %v1064 = vld [vmem:[#allocation11 + $0x48] sm:$0xff]
          %v1065 = vld [vmem:[#allocation11 + $0x50] sm:$0xff]
          %v1066 = vld [vmem:[#allocation11 + $0x58] sm:$0xff]
          %v1067 = vld [vmem:[#allocation11 + $0x60] sm:$0xff]
          %v1068 = vld [vmem:[#allocation11 + $0x68] sm:$0xff]
          %v1069 = vld [vmem:[#allocation11 + $0x70] sm:$0xff]
          %v1070 = vld [vmem:[#allocation11 + $0x78] sm:$0xff]
          %v1071 = vld [vmem:[%s8] sm:$0x1]
          %v1073 = vperm.slane %v1071, 0
          %1075 = vmatpush.msra.mxu0 %v1070
          %1076 = vmatpush.msra.mxu0 %v1069
          %1077 = vmatpush.msra.mxu0 %v1068
          %1078 = vmatpush.msra.mxu0 %v1067
          %1079 = vmatpush.msra.mxu0 %v1066
          %1080 = vmatpush.msra.mxu0 %v1065
          %1081 = vmatpush.msra.mxu0 %v1064
          %1082 = vmatpush.msra.mxu0 %v1063
          %1083 = vmatpush.msra.mxu0 %v1062
          %1084 = vmatpush.msra.mxu0 %v1061
          %1085 = vmatpush.msra.mxu0 %v1060
          %1086 = vmatpush.msra.mxu0 %v1059
          %1087 = vmatpush.msra.mxu0 %v1058
          %1088 = vmatpush.msra.mxu0 %v1057
          %1089 = vmatpush.msra.mxu0 %v1056
          %1090 = vmatpush.msra.mxu0 %v1055
          %1091 = vmatmul.f32.gmra.mxu0 %v1054
          %v1092 = vpop.f32.mrf.mxu0
          %v1093 = vadd.f32 %v1073, %v1092
          %1094 = vdwg.mxu0
          %1095 = vst [vmem:[%s487] sm:$0x3] %v1093
        $region96: #{tpu_custom_call.1} parent=55 // pred_fallthru
          _
        %s1096 = sand.u32 %s266, 1
        %s1097 = scalar_lea.sflag [#allocation5], %s1096
        %s1098 = sand.u32 %s266, 1
        %s1099 = smul.addr %s1098, 2
        %s1100 = scalar_lea.vmem [#allocation12], %s1099
        // Predicated region
        $region97: #{tpu_custom_call.1} parent=55 // pred_check
          %p1101 = pneg %p276
        $region98: #{tpu_custom_call.1} parent=55 // pred_check_branch
          %1103 = sbr.rel (%p1101) target = $region100
        $region99: #{tpu_custom_call.1} parent=55 // pred_region
          %1105 = vsyncadd %s1097, 0
          %s1106 = smul.addr %s34, 2
          %s1107 = scalar_lea.hbm %s9, %s1106
          %s1109 = sshll.u32 %s1100, 4
          %s1110 = int_to_ptr.vmem [resolvable:$true] %s1109
          %s1111 = sshll.u32 %s1107, 4
          %s1112 = int_to_ptr.hbm [resolvable:$true] %s1111
          %1114 = dma.vmem_to_hbm [thread:$0]  %s1110, 32, %s1112, %s1097
        $region100: #{tpu_custom_call.1} parent=55 // pred_fallthru
          _
      $region56: #{tpu_custom_call.1} parent=5 // pred_fallthru
        _
      %p1115 = scmp.le.s32.totalorder 2, %s25
      // Predicated region
      $region101: #{tpu_custom_call.1} parent=5 // pred_check
        %p1116 = pneg %p1115
      $region102: #{tpu_custom_call.1} parent=5 // pred_check_branch
        %1118 = sbr.rel (%p1116) target = $region104
      $region103: #{tpu_custom_call.1} parent=5 // pred_region
        %s1119 = ssub.s32 %s25, 2
        // Predicated region
        $region105: #{tpu_custom_call.1} parent=103 // pred_check
          %p1120 = pneg %p282
        $region106: #{tpu_custom_call.1} parent=103 // pred_check_branch
          %1122 = sbr.rel (%p1120) target = $region108
        $region107: #{tpu_custom_call.1} parent=103 // pred_region
          %s1123 = sand.u32 %s267, 1
          %s1124 = scalar_lea.sflag [#allocation5], %s1123
          %s1125 = sand.u32 %s267, 1
          %s1126 = smul.addr %s1125, 2
          %s1127 = scalar_lea.vmem [#allocation12], %s1126
          %1129 = dma.done %s1124, 32
        $region108: #{tpu_custom_call.1} parent=103 // pred_fallthru
          _
      $region104: #{tpu_custom_call.1} parent=5 // pred_fallthru
        _
    $region6: #{tpu_custom_call.1} parent=1 // loop_footer
      %s29 = sadd.s32 1, %s25
    $region7: #{tpu_custom_call.1} parent=1 // loop_footer_branch
      %24 = sbr.rel target = $region3
    $region8: #{tpu_custom_call.1} parent=1 // loop_exit
      _
    %1130 = vsyncpa [#allocation4], 1
    %s1131 = scalar_lea.sflag [#allocation4], 1
    %1132 = vsyncpa %s1131, 1
    %1133 = vsyncpa [#allocation7], 1
    %s1134 = scalar_lea.sflag [#allocation7], 1
    %1135 = vsyncpa %s1134, 1
    %1136 = vsyncpa [#allocation10], 1
    %1137 = vsyncpa [#allocation5], 1
    %s1138 = scalar_lea.sflag [#allocation5], 1
    %1139 = vsyncpa %s1138, 1

</llo_original>
